<compile_context>
chip_gen: v5e
topology: v5e:2x2
jax: 0.10.0
libtpu: 0.0.40
codegen_flags: <defaults>
</compile_context>

<pallas_src>
import functools
import math

import jax
import jax.numpy as jnp
from jax.experimental import pallas as pl
from jax.experimental.pallas import tpu as pltpu


# ------------------------------- helpers ------------------------------------

def _round_up(x, m):
    return ((x + m - 1) // m) * m


def _vmem_limit(nbytes):
    # Explicit scoped-VMEM request: 2x headroom, clamped to [32 MiB, 64 MiB]
    # (64 MiB is the v7x physical ceiling; v5e/v6e have 128 MiB so it's safe).
    return int(min(max(2 * nbytes, 32 << 20), 64 << 20))


def _pick_q_tile(S, target=256):
    # Largest multiple-of-8 divisor of S not exceeding `target` (or S itself).
    if S <= target:
        return S
    for t in range(target, 7, -8):
        if S % t == 0:
            return t
    return S


# --------------------------- attention block kernel --------------------------

def _attn_block_kernel(xq_ref, xs_ref, wq_ref, bq_ref, wkv_ref, bkv_ref,
                       wo_ref, bo_ref, g_ref, b_ref, o_ref, ctx_ref,
                       *, n_head, scale, eps):
    # xq_ref: [1, tq, D] query-row tile ; xs_ref: [1, S, D] full sequence.
    xq = xq_ref[0].astype(jnp.float32)                    # residual, f32
    xq_bf = xq_ref[0].astype(jnp.bfloat16)
    xs_bf = xs_ref[0].astype(jnp.bfloat16)
    D = xq.shape[-1]
    Dh = D // n_head

    # Projections: bf16 operands on the MXU, f32 accumulation.
    q = jnp.dot(xq_bf, wq_ref[...], preferred_element_type=jnp.float32) + bq_ref[...]
    kv = jnp.dot(xs_bf, wkv_ref[...], preferred_element_type=jnp.float32) + bkv_ref[...]
    k = kv[:, :D]
    v = kv[:, D:]

    # Per-head attention; head outputs are staged into a bf16 VMEM scratch so
    # the output projection is ONE full-contraction [tq,D]@[D,D] matmul.
    # TODO(synk): attention mask (s_mask) not applied; reference passes None.
    for h in range(n_head):
        qh = q[:, h * Dh:(h + 1) * Dh].astype(jnp.bfloat16)
        kh = k[:, h * Dh:(h + 1) * Dh].astype(jnp.bfloat16)
        vh = v[:, h * Dh:(h + 1) * Dh].astype(jnp.bfloat16)
        s = jax.lax.dot_general(
            qh, kh, dimension_numbers=(((1,), (1,)), ((), ())),
            preferred_element_type=jnp.float32) * scale          # [tq, S] f32
        m = jnp.max(s, axis=-1, keepdims=True)
        p = jnp.exp(s - m)
        p = p * pl.reciprocal(jnp.sum(p, axis=-1, keepdims=True), approx=True)
        oh = jnp.dot(p.astype(jnp.bfloat16), vh,
                     preferred_element_type=jnp.float32)          # [tq, Dh]
        ctx_ref[:, h * Dh:(h + 1) * Dh] = oh.astype(jnp.bfloat16)

    proj = jnp.dot(ctx_ref[...], wo_ref[...],
                   preferred_element_type=jnp.float32) + bo_ref[...]

    # residual add + LayerNorm1 (f32 math)
    y = proj + xq
    mu = jnp.mean(y, axis=-1, keepdims=True)
    var = jnp.mean((y - mu) ** 2, axis=-1, keepdims=True)
    yn = (y - mu) * jax.lax.rsqrt(var + eps)
    o_ref[0] = (yn * g_ref[...] + b_ref[...]).astype(o_ref.dtype)


def attention_block(x, wq, bq, wkv, bkv, wo, bo, gamma, beta, *, n_head, eps=1e-5):
    B, S, D = x.shape
    Dh = D // n_head
    scale = 1.0 / math.sqrt(Dh)
    tq = _pick_q_tile(S)
    grid = (B, S // tq)

    const = functools.partial  # brevity for constant-index weight specs
    wspec = lambda shape: pl.BlockSpec(shape, lambda b, qi: (0, 0),
                                       pipeline_mode=pl.Buffered(1))

    need = (2 * tq * D * 4          # query tile (double-buffered, f32)
            + 2 * S * D * 4         # full-sequence K/V input (double-buffered)
            + 2 * tq * D * 4        # output tile (double-buffered)
            + (D * D + D * 2 * D + D * D) * 2   # bf16 weights (single-buffered)
            + (2 * D + 3 * D + 3 * D) * 4        # biases / LN params
            + tq * D * 2            # ctx scratch (bf16)
            + n_head * tq * S * 4)  # scores working set (f32)

    return pl.pallas_call(
        functools.partial(_attn_block_kernel, n_head=n_head, scale=scale, eps=eps),
        out_shape=jax.ShapeDtypeStruct((B, S, D), x.dtype),
        grid=grid,
        in_specs=[
            pl.BlockSpec((1, tq, D), lambda b, qi: (b, qi, 0)),   # query tile
            pl.BlockSpec((1, S, D), lambda b, qi: (b, 0, 0)),     # full seq for K/V
            wspec((D, D)),                                        # wq (bf16)
            wspec((1, D)),                                        # bq
            wspec((D, 2 * D)),                                    # wkv (bf16)
            wspec((1, 2 * D)),                                    # bkv
            wspec((D, D)),                                        # wo (bf16)
            wspec((1, D)),                                        # bo
            wspec((1, D)),                                        # ln1 gamma
            wspec((1, D)),                                        # ln1 beta
        ],
        out_specs=pl.BlockSpec((1, tq, D), lambda b, qi: (b, qi, 0)),
        scratch_shapes=[pltpu.VMEM((tq, D), jnp.bfloat16)],
        compiler_params=pltpu.CompilerParams(
            dimension_semantics=("parallel", "parallel"),
            vmem_limit_bytes=_vmem_limit(need)),
    )(x, x, wq, bq.reshape(1, D), wkv, bkv.reshape(1, 2 * D),
      wo, bo.reshape(1, D), gamma.reshape(1, D), beta.reshape(1, D))


# ------------------------------ FFN block kernel -----------------------------

def _ffn_block_kernel(x_ref, w1_ref, b1_ref, w2_ref, b2_ref, g_ref, b_ref,
                      o_ref, *, eps):
    # x_ref: [tm, D] row tile. Hidden activation lives only in VMEM/vregs.
    x = x_ref[...].astype(jnp.float32)
    x_bf = x_ref[...].astype(jnp.bfloat16)
    h = jnp.dot(x_bf, w1_ref[...], preferred_element_type=jnp.float32) + b1_ref[...]
    h = jnp.maximum(h, 0.0)                               # ReLU (f32)
    f = jnp.dot(h.astype(jnp.bfloat16), w2_ref[...],
                preferred_element_type=jnp.float32) + b2_ref[...]
    # residual add + LayerNorm2 (f32 math)
    y = f + x
    mu = jnp.mean(y, axis=-1, keepdims=True)
    var = jnp.mean((y - mu) ** 2, axis=-1, keepdims=True)
    yn = (y - mu) * jax.lax.rsqrt(var + eps)
    o_ref[...] = (yn * g_ref[...] + b_ref[...]).astype(o_ref.dtype)


def ffn_block(x2d, w1, b1, w2, b2, gamma, beta, *, eps=1e-5):
    # TODO(synk): for very large ffn_hidden on v7x, add an H-reduction grid
    # axis with a [tm, D] f32 accumulator instead of keeping both weights
    # fully resident.
    M, D = x2d.shape
    H = w1.shape[1]
    tm = min(512, _round_up(M, 8))
    Mp = pl.cdiv(M, tm) * tm
    xpad = x2d if Mp == M else jnp.pad(x2d, ((0, Mp - M), (0, 0)))

    wspec = lambda shape: pl.BlockSpec(shape, lambda i: (0, 0),
                                       pipeline_mode=pl.Buffered(1))

    need = (2 * tm * D * 4          # input tile (double-buffered, f32)
            + 2 * tm * D * 4        # output tile (double-buffered)
            + (D * H + H * D) * 2   # bf16 weights (single-buffered)
            + (H + 3 * D) * 4       # biases / LN params
            + tm * H * 4)           # hidden activation working set

    out = pl.pallas_call(
        functools.partial(_ffn_block_kernel, eps=eps),
        out_shape=jax.ShapeDtypeStruct((Mp, D), x2d.dtype),
        grid=(Mp // tm,),
        in_specs=[
            pl.BlockSpec((tm, D), lambda i: (i, 0)),
            wspec((D, H)),          # fc1 weight (bf16)
            wspec((1, H)),          # fc1 bias
            wspec((H, D)),          # fc2 weight (bf16)
            wspec((1, D)),          # fc2 bias
            wspec((1, D)),          # ln2 gamma
            wspec((1, D)),          # ln2 beta
        ],
        out_specs=pl.BlockSpec((tm, D), lambda i: (i, 0)),
        compiler_params=pltpu.CompilerParams(
            dimension_semantics=("parallel",),
            vmem_limit_bytes=_vmem_limit(need)),
    )(xpad, w1, b1.reshape(1, H), w2, b2.reshape(1, D),
      gamma.reshape(1, D), beta.reshape(1, D))
    return out if Mp == M else out[:M]


# ------------------------------ model wrapper --------------------------------

def sinusoidal_positional_encoding(max_len, d_model):
    pos = jnp.arange(max_len, dtype=jnp.float32)[:, None]
    i = jnp.arange(0, d_model, 2, dtype=jnp.float32)[None, :]
    div = jnp.exp(-math.log(10000.0) * i / d_model)
    pe = jnp.zeros((max_len, d_model), dtype=jnp.float32)
    pe = pe.at[:, 0::2].set(jnp.sin(pos * div))
    pe = pe.at[:, 1::2].set(jnp.cos(pos * div))
    return pe


def init_params(key, vocab_size, max_len, d_model, ffn_hidden, n_head, n_layer):
    def dense(k, fan_in, fan_out):
        k1, k2 = jax.random.split(k)
        bound = 1.0 / math.sqrt(fan_in)
        w = jax.random.uniform(k1, (fan_in, fan_out), jnp.float32, -bound, bound)
        b = jax.random.uniform(k2, (fan_out,), jnp.float32, -bound, bound)
        return w, b

    keys = jax.random.split(key, 1 + n_layer)
    params = {
        "tok_emb": jax.random.normal(keys[0], (vocab_size, d_model), jnp.float32) * 0.02,
        "pos_enc": sinusoidal_positional_encoding(max_len, d_model),
        "layers": [],
    }
    for li in range(n_layer):
        lk = jax.random.split(keys[1 + li], 6)
        wq, bq = dense(lk[0], d_model, d_model)
        wk, bk = dense(lk[1], d_model, d_model)
        wv, bv = dense(lk[2], d_model, d_model)
        wo, bo = dense(lk[3], d_model, d_model)
        w1, b1 = dense(lk[4], d_model, ffn_hidden)
        w2, b2 = dense(lk[5], ffn_hidden, d_model)
        layer = {
            # matmul weights stored bf16 (MXU-native); biases / LN params f32
            "wq": wq.astype(jnp.bfloat16),
            "bq": bq,
            "wkv": jnp.concatenate([wk, wv], axis=1).astype(jnp.bfloat16),
            "bkv": jnp.concatenate([bk, bv], axis=0),
            "wo": wo.astype(jnp.bfloat16),
            "bo": bo,
            "ln1_g": jnp.ones((d_model,), jnp.float32),
            "ln1_b": jnp.zeros((d_model,), jnp.float32),
            "ffn_w1": w1.astype(jnp.bfloat16),
            "ffn_b1": b1,
            "ffn_w2": w2.astype(jnp.bfloat16),
            "ffn_b2": b2,
            "ln2_g": jnp.ones((d_model,), jnp.float32),
            "ln2_b": jnp.zeros((d_model,), jnp.float32),
        }
        params["layers"].append(layer)
    return params


def encoder_layer(x, layer, n_head):
    B, S, D = x.shape
    # fused: QKV proj + attention + single out proj + residual + LayerNorm1
    x = attention_block(x, layer["wq"], layer["bq"], layer["wkv"], layer["bkv"],
                        layer["wo"], layer["bo"],
                        layer["ln1_g"], layer["ln1_b"], n_head=n_head)
    # fused: fc1 + ReLU + fc2 + residual + LayerNorm2
    x2d = ffn_block(x.reshape(B * S, D),
                    layer["ffn_w1"], layer["ffn_b1"],
                    layer["ffn_w2"], layer["ffn_b2"],
                    layer["ln2_g"], layer["ln2_b"])
    return x2d.reshape(B, S, D)


def encoder_forward(params, tokens, n_head):
    # tokens: [B, S] int32
    B, S = tokens.shape
    # embedding gather (glue, plain JAX) + sinusoidal positional encoding
    x = jnp.take(params["tok_emb"], tokens, axis=0) + params["pos_enc"][:S][None, :, :]
    for layer in params["layers"]:
        x = encoder_layer(x, layer, n_head)
    return x  # reference forward does not apply the final self.norm


# ---------------------------------- main -------------------------------------

if __name__ == "__main__":
    enc_voc_size = 100
    max_len = 32
    d_model = 128        # lane-dense (multiple of 128)
    ffn_hidden = 256
    n_head = 4           # head dim 32
    n_layer = 2
    B, S = 2, 16

    key = jax.random.PRNGKey(0)
    pkey, dkey = jax.random.split(key)
    params = init_params(pkey, enc_voc_size, max_len, d_model, ffn_hidden,
                         n_head, n_layer)
    tokens = jax.random.randint(dkey, (B, S), 0, enc_voc_size, dtype=jnp.int32)

    out = encoder_forward(params, tokens, n_head)
    out = jax.block_until_ready(out)
    assert out.shape == (B, S, d_model)
    assert bool(jnp.all(jnp.isfinite(out)))
    print("KERNEL_OK")
</pallas_src>

<mosaic_0001>
module attributes {stable_mosaic.version = 11 : i64} {
  func.func @_attn_block_kernel(%arg0: i32, %arg1: i32, %arg2: memref<1x16x128xf32, #tpu.memory_space<vmem>>, %arg3: memref<1x16x128xf32, #tpu.memory_space<vmem>>, %arg4: memref<128x128xbf16, #tpu.memory_space<vmem>>, %arg5: memref<1x128xf32, #tpu.memory_space<vmem>>, %arg6: memref<128x256xbf16, #tpu.memory_space<vmem>>, %arg7: memref<1x256xf32, #tpu.memory_space<vmem>>, %arg8: memref<128x128xbf16, #tpu.memory_space<vmem>>, %arg9: memref<1x128xf32, #tpu.memory_space<vmem>>, %arg10: memref<1x128xf32, #tpu.memory_space<vmem>>, %arg11: memref<1x128xf32, #tpu.memory_space<vmem>>, %arg12: memref<1x16x128xf32, #tpu.memory_space<vmem>>, %arg13: memref<16x128xbf16, #tpu.memory_space<vmem>>) attributes {dimension_semantics = [#tpu.dimension_semantics<parallel>, #tpu.dimension_semantics<parallel>], iteration_bounds = array<i64: 2, 1>, scalar_prefetch = 0 : i64, scratch_operands = 1 : i64, tpu.core_type = #tpu.core_type<tc>, window_params = [{transform_indices = @transform_0, window_bounds = array<i64: 1, 16, 128>}, {transform_indices = @transform_1, window_bounds = array<i64: 1, 16, 128>}, {pipeline_mode = #tpu.pipeline_mode<synchronous>, transform_indices = @transform_2, window_bounds = array<i64: 128, 128>}, {pipeline_mode = #tpu.pipeline_mode<synchronous>, transform_indices = @transform_3, window_bounds = array<i64: 1, 128>}, {pipeline_mode = #tpu.pipeline_mode<synchronous>, transform_indices = @transform_4, window_bounds = array<i64: 128, 256>}, {pipeline_mode = #tpu.pipeline_mode<synchronous>, transform_indices = @transform_5, window_bounds = array<i64: 1, 256>}, {pipeline_mode = #tpu.pipeline_mode<synchronous>, transform_indices = @transform_6, window_bounds = array<i64: 128, 128>}, {pipeline_mode = #tpu.pipeline_mode<synchronous>, transform_indices = @transform_7, window_bounds = array<i64: 1, 128>}, {pipeline_mode = #tpu.pipeline_mode<synchronous>, transform_indices = @transform_8, window_bounds = array<i64: 1, 128>}, {pipeline_mode = #tpu.pipeline_mode<synchronous>, transform_indices = @transform_9, window_bounds = array<i64: 1, 128>}, {transform_indices = @transform_10, window_bounds = array<i64: 1, 16, 128>}]} {
    %c0 = arith.constant 0 : index
    %c0_0 = arith.constant 0 : index
    %c0_1 = arith.constant 0 : index
    %0 = vector.load %arg2[%c0, %c0_0, %c0_1] : memref<1x16x128xf32, #tpu.memory_space<vmem>>, vector<1x16x128xf32>
    %1 = vector.shape_cast %0 : vector<1x16x128xf32> to vector<16x128xf32>
    %c0_2 = arith.constant 0 : index
    %c0_3 = arith.constant 0 : index
    %c0_4 = arith.constant 0 : index
    %2 = vector.load %arg2[%c0_2, %c0_3, %c0_4] : memref<1x16x128xf32, #tpu.memory_space<vmem>>, vector<1x16x128xf32>
    %3 = vector.shape_cast %2 : vector<1x16x128xf32> to vector<16x128xf32>
    %4 = arith.truncf %3 : vector<16x128xf32> to vector<16x128xbf16>
    %c0_5 = arith.constant 0 : index
    %c0_6 = arith.constant 0 : index
    %c0_7 = arith.constant 0 : index
    %5 = vector.load %arg3[%c0_5, %c0_6, %c0_7] : memref<1x16x128xf32, #tpu.memory_space<vmem>>, vector<1x16x128xf32>
    %6 = vector.shape_cast %5 : vector<1x16x128xf32> to vector<16x128xf32>
    %7 = arith.truncf %6 : vector<16x128xf32> to vector<16x128xbf16>
    %c0_8 = arith.constant 0 : index
    %c0_9 = arith.constant 0 : index
    %8 = vector.load %arg4[%c0_8, %c0_9] : memref<128x128xbf16, #tpu.memory_space<vmem>>, vector<128x128xbf16>
    %cst = arith.constant dense<0.000000e+00> : vector<16x128xf32>
    %9 = tpu.matmul %4, %8, %cst {dimension_numbers = #tpu.dot_dimension_numbers<[1], [0], [0], [1], [0, 0, 1, 1], [], []>} : vector<16x128xbf16>, vector<128x128xbf16>, vector<16x128xf32> -> vector<16x128xf32>
    %c0_10 = arith.constant 0 : index
    %c0_11 = arith.constant 0 : index
    %10 = vector.load %arg5[%c0_10, %c0_11] : memref<1x128xf32, #tpu.memory_space<vmem>>, vector<1x128xf32>
    %11 = vector.broadcast %10 : vector<1x128xf32> to vector<16x128xf32>
    %12 = arith.addf %9, %11 : vector<16x128xf32>
    %c0_12 = arith.constant 0 : index
    %c0_13 = arith.constant 0 : index
    %13 = vector.load %arg6[%c0_12, %c0_13] : memref<128x256xbf16, #tpu.memory_space<vmem>>, vector<128x256xbf16>
    %cst_14 = arith.constant dense<0.000000e+00> : vector<16x256xf32>
    %14 = tpu.matmul %7, %13, %cst_14 {dimension_numbers = #tpu.dot_dimension_numbers<[1], [0], [0], [1], [0, 0, 1, 1], [], []>} : vector<16x128xbf16>, vector<128x256xbf16>, vector<16x256xf32> -> vector<16x256xf32>
    %c0_15 = arith.constant 0 : index
    %c0_16 = arith.constant 0 : index
    %15 = vector.load %arg7[%c0_15, %c0_16] : memref<1x256xf32, #tpu.memory_space<vmem>>, vector<1x256xf32>
    %16 = vector.broadcast %15 : vector<1x256xf32> to vector<16x256xf32>
    %17 = arith.addf %14, %16 : vector<16x256xf32>
    %18 = vector.extract_strided_slice %17 {offsets = [0, 0], sizes = [16, 128], strides = [1, 1]} : vector<16x256xf32> to vector<16x128xf32>
    %19 = vector.extract_strided_slice %17 {offsets = [0, 128], sizes = [16, 128], strides = [1, 1]} : vector<16x256xf32> to vector<16x128xf32>
    %20 = vector.extract_strided_slice %12 {offsets = [0, 0], sizes = [16, 32], strides = [1, 1]} : vector<16x128xf32> to vector<16x32xf32>
    %21 = arith.truncf %20 : vector<16x32xf32> to vector<16x32xbf16>
    %22 = vector.extract_strided_slice %18 {offsets = [0, 0], sizes = [16, 32], strides = [1, 1]} : vector<16x128xf32> to vector<16x32xf32>
    %23 = arith.truncf %22 : vector<16x32xf32> to vector<16x32xbf16>
    %24 = vector.extract_strided_slice %19 {offsets = [0, 0], sizes = [16, 32], strides = [1, 1]} : vector<16x128xf32> to vector<16x32xf32>
    %25 = arith.truncf %24 : vector<16x32xf32> to vector<16x32xbf16>
    %cst_17 = arith.constant dense<0.000000e+00> : vector<16x16xf32>
    %26 = tpu.matmul %21, %23, %cst_17 {dimension_numbers = #tpu.dot_dimension_numbers<[1], [1], [0], [0], [0, 0, 1, 0], [], []>} : vector<16x32xbf16>, vector<16x32xbf16>, vector<16x16xf32> -> vector<16x16xf32>
    %cst_18 = arith.constant 0.176776692 : f32
    %27 = vector.broadcast %cst_18 : f32 to vector<16x16xf32>
    %28 = arith.mulf %26, %27 : vector<16x16xf32>
    %cst_19 = arith.constant dense<0xFF800000> : vector<16xf32>
    %29 = vector.multi_reduction <maximumf>, %28, %cst_19 [1] : vector<16x16xf32> to vector<16xf32>
    %30 = vector.shape_cast %29 : vector<16xf32> to vector<16x1xf32>
    %31 = vector.broadcast %30 : vector<16x1xf32> to vector<16x16xf32>
    %32 = arith.subf %28, %31 : vector<16x16xf32>
    %33 = math.exp %32 : vector<16x16xf32>
    %cst_20 = arith.constant dense<0.000000e+00> : vector<16xf32>
    %34 = vector.multi_reduction <add>, %33, %cst_20 [1] : vector<16x16xf32> to vector<16xf32>
    %35 = vector.shape_cast %34 : vector<16xf32> to vector<16x1xf32>
    %36 = tpu.reciprocal %35 {approx = true} : vector<16x1xf32> -> vector<16x1xf32>
    %37 = vector.broadcast %36 : vector<16x1xf32> to vector<16x16xf32>
    %38 = arith.mulf %33, %37 : vector<16x16xf32>
    %39 = arith.truncf %38 : vector<16x16xf32> to vector<16x16xbf16>
    %cst_21 = arith.constant dense<0.000000e+00> : vector<16x32xf32>
    %40 = tpu.matmul %39, %25, %cst_21 {dimension_numbers = #tpu.dot_dimension_numbers<[1], [0], [0], [1], [0, 0, 1, 1], [], []>} : vector<16x16xbf16>, vector<16x32xbf16>, vector<16x32xf32> -> vector<16x32xf32>
    %41 = arith.truncf %40 : vector<16x32xf32> to vector<16x32xbf16>
    %c0_22 = arith.constant 0 : index
    %c0_23 = arith.constant 0 : index
    %42 = vector.load %arg13[%c0_22, %c0_23] : memref<16x128xbf16, #tpu.memory_space<vmem>>, vector<16x32xbf16>
    tpu.vector_store %arg13[%c0_22, %c0_23], %41 {strides = array<i32>} : memref<16x128xbf16, #tpu.memory_space<vmem>>, vector<16x32xbf16>,
    %43 = vector.extract_strided_slice %12 {offsets = [0, 32], sizes = [16, 32], strides = [1, 1]} : vector<16x128xf32> to vector<16x32xf32>
    %44 = arith.truncf %43 : vector<16x32xf32> to vector<16x32xbf16>
    %45 = vector.extract_strided_slice %18 {offsets = [0, 32], sizes = [16, 32], strides = [1, 1]} : vector<16x128xf32> to vector<16x32xf32>
    %46 = arith.truncf %45 : vector<16x32xf32> to vector<16x32xbf16>
    %47 = vector.extract_strided_slice %19 {offsets = [0, 32], sizes = [16, 32], strides = [1, 1]} : vector<16x128xf32> to vector<16x32xf32>
    %48 = arith.truncf %47 : vector<16x32xf32> to vector<16x32xbf16>
    %cst_24 = arith.constant dense<0.000000e+00> : vector<16x16xf32>
    %49 = tpu.matmul %44, %46, %cst_24 {dimension_numbers = #tpu.dot_dimension_numbers<[1], [1], [0], [0], [0, 0, 1, 0], [], []>} : vector<16x32xbf16>, vector<16x32xbf16>, vector<16x16xf32> -> vector<16x16xf32>
    %cst_25 = arith.constant 0.176776692 : f32
    %50 = vector.broadcast %cst_25 : f32 to vector<16x16xf32>
    %51 = arith.mulf %49, %50 : vector<16x16xf32>
    %cst_26 = arith.constant dense<0xFF800000> : vector<16xf32>
    %52 = vector.multi_reduction <maximumf>, %51, %cst_26 [1] : vector<16x16xf32> to vector<16xf32>
    %53 = vector.shape_cast %52 : vector<16xf32> to vector<16x1xf32>
    %54 = vector.broadcast %53 : vector<16x1xf32> to vector<16x16xf32>
    %55 = arith.subf %51, %54 : vector<16x16xf32>
    %56 = math.exp %55 : vector<16x16xf32>
    %cst_27 = arith.constant dense<0.000000e+00> : vector<16xf32>
    %57 = vector.multi_reduction <add>, %56, %cst_27 [1] : vector<16x16xf32> to vector<16xf32>
    %58 = vector.shape_cast %57 : vector<16xf32> to vector<16x1xf32>
    %59 = tpu.reciprocal %58 {approx = true} : vector<16x1xf32> -> vector<16x1xf32>
    %60 = vector.broadcast %59 : vector<16x1xf32> to vector<16x16xf32>
    %61 = arith.mulf %56, %60 : vector<16x16xf32>
    %62 = arith.truncf %61 : vector<16x16xf32> to vector<16x16xbf16>
    %cst_28 = arith.constant dense<0.000000e+00> : vector<16x32xf32>
    %63 = tpu.matmul %62, %48, %cst_28 {dimension_numbers = #tpu.dot_dimension_numbers<[1], [0], [0], [1], [0, 0, 1, 1], [], []>} : vector<16x16xbf16>, vector<16x32xbf16>, vector<16x32xf32> -> vector<16x32xf32>
    %64 = arith.truncf %63 : vector<16x32xf32> to vector<16x32xbf16>
    %c0_29 = arith.constant 0 : index
    %c32 = arith.constant 32 : index
    %65 = vector.load %arg13[%c0_29, %c32] : memref<16x128xbf16, #tpu.memory_space<vmem>>, vector<16x32xbf16>
    tpu.vector_store %arg13[%c0_29, %c32], %64 {strides = array<i32>} : memref<16x128xbf16, #tpu.memory_space<vmem>>, vector<16x32xbf16>,
    %66 = vector.extract_strided_slice %12 {offsets = [0, 64], sizes = [16, 32], strides = [1, 1]} : vector<16x128xf32> to vector<16x32xf32>
    %67 = arith.truncf %66 : vector<16x32xf32> to vector<16x32xbf16>
    %68 = vector.extract_strided_slice %18 {offsets = [0, 64], sizes = [16, 32], strides = [1, 1]} : vector<16x128xf32> to vector<16x32xf32>
    %69 = arith.truncf %68 : vector<16x32xf32> to vector<16x32xbf16>
    %70 = vector.extract_strided_slice %19 {offsets = [0, 64], sizes = [16, 32], strides = [1, 1]} : vector<16x128xf32> to vector<16x32xf32>
    %71 = arith.truncf %70 : vector<16x32xf32> to vector<16x32xbf16>
    %cst_30 = arith.constant dense<0.000000e+00> : vector<16x16xf32>
    %72 = tpu.matmul %67, %69, %cst_30 {dimension_numbers = #tpu.dot_dimension_numbers<[1], [1], [0], [0], [0, 0, 1, 0], [], []>} : vector<16x32xbf16>, vector<16x32xbf16>, vector<16x16xf32> -> vector<16x16xf32>
    %cst_31 = arith.constant 0.176776692 : f32
    %73 = vector.broadcast %cst_31 : f32 to vector<16x16xf32>
    %74 = arith.mulf %72, %73 : vector<16x16xf32>
    %cst_32 = arith.constant dense<0xFF800000> : vector<16xf32>
    %75 = vector.multi_reduction <maximumf>, %74, %cst_32 [1] : vector<16x16xf32> to vector<16xf32>
    %76 = vector.shape_cast %75 : vector<16xf32> to vector<16x1xf32>
    %77 = vector.broadcast %76 : vector<16x1xf32> to vector<16x16xf32>
    %78 = arith.subf %74, %77 : vector<16x16xf32>
    %79 = math.exp %78 : vector<16x16xf32>
    %cst_33 = arith.constant dense<0.000000e+00> : vector<16xf32>
    %80 = vector.multi_reduction <add>, %79, %cst_33 [1] : vector<16x16xf32> to vector<16xf32>
    %81 = vector.shape_cast %80 : vector<16xf32> to vector<16x1xf32>
    %82 = tpu.reciprocal %81 {approx = true} : vector<16x1xf32> -> vector<16x1xf32>
    %83 = vector.broadcast %82 : vector<16x1xf32> to vector<16x16xf32>
    %84 = arith.mulf %79, %83 : vector<16x16xf32>
    %85 = arith.truncf %84 : vector<16x16xf32> to vector<16x16xbf16>
    %cst_34 = arith.constant dense<0.000000e+00> : vector<16x32xf32>
    %86 = tpu.matmul %85, %71, %cst_34 {dimension_numbers = #tpu.dot_dimension_numbers<[1], [0], [0], [1], [0, 0, 1, 1], [], []>} : vector<16x16xbf16>, vector<16x32xbf16>, vector<16x32xf32> -> vector<16x32xf32>
    %87 = arith.truncf %86 : vector<16x32xf32> to vector<16x32xbf16>
    %c0_35 = arith.constant 0 : index
    %c64 = arith.constant 64 : index
    %88 = vector.load %arg13[%c0_35, %c64] : memref<16x128xbf16, #tpu.memory_space<vmem>>, vector<16x32xbf16>
    tpu.vector_store %arg13[%c0_35, %c64], %87 {strides = array<i32>} : memref<16x128xbf16, #tpu.memory_space<vmem>>, vector<16x32xbf16>,
    %89 = vector.extract_strided_slice %12 {offsets = [0, 96], sizes = [16, 32], strides = [1, 1]} : vector<16x128xf32> to vector<16x32xf32>
    %90 = arith.truncf %89 : vector<16x32xf32> to vector<16x32xbf16>
    %91 = vector.extract_strided_slice %18 {offsets = [0, 96], sizes = [16, 32], strides = [1, 1]} : vector<16x128xf32> to vector<16x32xf32>
    %92 = arith.truncf %91 : vector<16x32xf32> to vector<16x32xbf16>
    %93 = vector.extract_strided_slice %19 {offsets = [0, 96], sizes = [16, 32], strides = [1, 1]} : vector<16x128xf32> to vector<16x32xf32>
    %94 = arith.truncf %93 : vector<16x32xf32> to vector<16x32xbf16>
    %cst_36 = arith.constant dense<0.000000e+00> : vector<16x16xf32>
    %95 = tpu.matmul %90, %92, %cst_36 {dimension_numbers = #tpu.dot_dimension_numbers<[1], [1], [0], [0], [0, 0, 1, 0], [], []>} : vector<16x32xbf16>, vector<16x32xbf16>, vector<16x16xf32> -> vector<16x16xf32>
    %cst_37 = arith.constant 0.176776692 : f32
    %96 = vector.broadcast %cst_37 : f32 to vector<16x16xf32>
    %97 = arith.mulf %95, %96 : vector<16x16xf32>
    %cst_38 = arith.constant dense<0xFF800000> : vector<16xf32>
    %98 = vector.multi_reduction <maximumf>, %97, %cst_38 [1] : vector<16x16xf32> to vector<16xf32>
    %99 = vector.shape_cast %98 : vector<16xf32> to vector<16x1xf32>
    %100 = vector.broadcast %99 : vector<16x1xf32> to vector<16x16xf32>
    %101 = arith.subf %97, %100 : vector<16x16xf32>
    %102 = math.exp %101 : vector<16x16xf32>
    %cst_39 = arith.constant dense<0.000000e+00> : vector<16xf32>
    %103 = vector.multi_reduction <add>, %102, %cst_39 [1] : vector<16x16xf32> to vector<16xf32>
    %104 = vector.shape_cast %103 : vector<16xf32> to vector<16x1xf32>
    %105 = tpu.reciprocal %104 {approx = true} : vector<16x1xf32> -> vector<16x1xf32>
    %106 = vector.broadcast %105 : vector<16x1xf32> to vector<16x16xf32>
    %107 = arith.mulf %102, %106 : vector<16x16xf32>
    %108 = arith.truncf %107 : vector<16x16xf32> to vector<16x16xbf16>
    %cst_40 = arith.constant dense<0.000000e+00> : vector<16x32xf32>
    %109 = tpu.matmul %108, %94, %cst_40 {dimension_numbers = #tpu.dot_dimension_numbers<[1], [0], [0], [1], [0, 0, 1, 1], [], []>} : vector<16x16xbf16>, vector<16x32xbf16>, vector<16x32xf32> -> vector<16x32xf32>
    %110 = arith.truncf %109 : vector<16x32xf32> to vector<16x32xbf16>
    %c0_41 = arith.constant 0 : index
    %c96 = arith.constant 96 : index
    %111 = vector.load %arg13[%c0_41, %c96] : memref<16x128xbf16, #tpu.memory_space<vmem>>, vector<16x32xbf16>
    tpu.vector_store %arg13[%c0_41, %c96], %110 {strides = array<i32>} : memref<16x128xbf16, #tpu.memory_space<vmem>>, vector<16x32xbf16>,
    %c0_42 = arith.constant 0 : index
    %c0_43 = arith.constant 0 : index
    %112 = vector.load %arg13[%c0_42, %c0_43] : memref<16x128xbf16, #tpu.memory_space<vmem>>, vector<16x128xbf16>
    %c0_44 = arith.constant 0 : index
    %c0_45 = arith.constant 0 : index
    %113 = vector.load %arg8[%c0_44, %c0_45] : memref<128x128xbf16, #tpu.memory_space<vmem>>, vector<128x128xbf16>
    %cst_46 = arith.constant dense<0.000000e+00> : vector<16x128xf32>
    %114 = tpu.matmul %112, %113, %cst_46 {dimension_numbers = #tpu.dot_dimension_numbers<[1], [0], [0], [1], [0, 0, 1, 1], [], []>} : vector<16x128xbf16>, vector<128x128xbf16>, vector<16x128xf32> -> vector<16x128xf32>
    %c0_47 = arith.constant 0 : index
    %c0_48 = arith.constant 0 : index
    %115 = vector.load %arg9[%c0_47, %c0_48] : memref<1x128xf32, #tpu.memory_space<vmem>>, vector<1x128xf32>
    %116 = vector.broadcast %115 : vector<1x128xf32> to vector<16x128xf32>
    %117 = arith.addf %114, %116 : vector<16x128xf32>
    %118 = arith.addf %117, %1 : vector<16x128xf32>
    %cst_49 = arith.constant dense<0.000000e+00> : vector<16xf32>
    %119 = vector.multi_reduction <add>, %118, %cst_49 [1] : vector<16x128xf32> to vector<16xf32>
    %120 = vector.shape_cast %119 : vector<16xf32> to vector<16x1xf32>
    %cst_50 = arith.constant 1.280000e+02 : f32
    %121 = vector.broadcast %cst_50 : f32 to vector<16x1xf32>
    %122 = arith.divf %120, %121 : vector<16x1xf32>
    %123 = vector.broadcast %122 : vector<16x1xf32> to vector<16x128xf32>
    %124 = arith.subf %118, %123 : vector<16x128xf32>
    %125 = arith.mulf %124, %124 : vector<16x128xf32>
    %cst_51 = arith.constant dense<0.000000e+00> : vector<16xf32>
    %126 = vector.multi_reduction <add>, %125, %cst_51 [1] : vector<16x128xf32> to vector<16xf32>
    %127 = vector.shape_cast %126 : vector<16xf32> to vector<16x1xf32>
    %cst_52 = arith.constant 1.280000e+02 : f32
    %128 = vector.broadcast %cst_52 : f32 to vector<16x1xf32>
    %129 = arith.divf %127, %128 : vector<16x1xf32>
    %130 = vector.broadcast %122 : vector<16x1xf32> to vector<16x128xf32>
    %131 = arith.subf %118, %130 : vector<16x128xf32>
    %cst_53 = arith.constant 9.99999974E-6 : f32
    %132 = vector.broadcast %cst_53 : f32 to vector<16x1xf32>
    %133 = arith.addf %129, %132 : vector<16x1xf32>
    %134 = math.rsqrt %133 : vector<16x1xf32>
    %135 = vector.broadcast %134 : vector<16x1xf32> to vector<16x128xf32>
    %136 = arith.mulf %131, %135 : vector<16x128xf32>
    %c0_54 = arith.constant 0 : index
    %c0_55 = arith.constant 0 : index
    %137 = vector.load %arg10[%c0_54, %c0_55] : memref<1x128xf32, #tpu.memory_space<vmem>>, vector<1x128xf32>
    %138 = vector.broadcast %137 : vector<1x128xf32> to vector<16x128xf32>
    %139 = arith.mulf %136, %138 : vector<16x128xf32>
    %c0_56 = arith.constant 0 : index
    %c0_57 = arith.constant 0 : index
    %140 = vector.load %arg11[%c0_56, %c0_57] : memref<1x128xf32, #tpu.memory_space<vmem>>, vector<1x128xf32>
    %141 = vector.broadcast %140 : vector<1x128xf32> to vector<16x128xf32>
    %142 = arith.addf %139, %141 : vector<16x128xf32>
    %c0_58 = arith.constant 0 : index
    %c0_59 = arith.constant 0 : index
    %c0_60 = arith.constant 0 : index
    %143 = vector.load %arg12[%c0_58, %c0_59, %c0_60] : memref<1x16x128xf32, #tpu.memory_space<vmem>>, vector<1x16x128xf32>
    %144 = vector.shape_cast %143 : vector<1x16x128xf32> to vector<16x128xf32>
    %145 = vector.shape_cast %142 : vector<16x128xf32> to vector<1x16x128xf32>
    tpu.vector_store %arg12[%c0_58, %c0_59, %c0_60], %145 {strides = array<i32>} : memref<1x16x128xf32, #tpu.memory_space<vmem>>, vector<1x16x128xf32>,
    return
  }
  func.func @transform_0(%arg0: i32, %arg1: i32) -> (i32, i32, i32) {
    %c0_i32 = arith.constant 0 : i32
    %c0_i32_0 = arith.constant 0 : i32
    return %arg0, %arg1, %c0_i32 : i32, i32, i32
  }
  func.func @transform_1(%arg0: i32, %arg1: i32) -> (i32, i32, i32) {
    %c0_i32 = arith.constant 0 : i32
    %c0_i32_0 = arith.constant 0 : i32
    %c0_i32_1 = arith.constant 0 : i32
    return %arg0, %c0_i32, %c0_i32_0 : i32, i32, i32
  }
  func.func @transform_2(%arg0: i32, %arg1: i32) -> (i32, i32) {
    %c0_i32 = arith.constant 0 : i32
    %c0_i32_0 = arith.constant 0 : i32
    %c0_i32_1 = arith.constant 0 : i32
    return %c0_i32, %c0_i32_0 : i32, i32
  }
  func.func @transform_3(%arg0: i32, %arg1: i32) -> (i32, i32) {
    %c0_i32 = arith.constant 0 : i32
    %c0_i32_0 = arith.constant 0 : i32
    %c0_i32_1 = arith.constant 0 : i32
    return %c0_i32, %c0_i32_0 : i32, i32
  }
  func.func @transform_4(%arg0: i32, %arg1: i32) -> (i32, i32) {
    %c0_i32 = arith.constant 0 : i32
    %c0_i32_0 = arith.constant 0 : i32
    %c0_i32_1 = arith.constant 0 : i32
    return %c0_i32, %c0_i32_0 : i32, i32
  }
  func.func @transform_5(%arg0: i32, %arg1: i32) -> (i32, i32) {
    %c0_i32 = arith.constant 0 : i32
    %c0_i32_0 = arith.constant 0 : i32
    %c0_i32_1 = arith.constant 0 : i32
    return %c0_i32, %c0_i32_0 : i32, i32
  }
  func.func @transform_6(%arg0: i32, %arg1: i32) -> (i32, i32) {
    %c0_i32 = arith.constant 0 : i32
    %c0_i32_0 = arith.constant 0 : i32
    %c0_i32_1 = arith.constant 0 : i32
    return %c0_i32, %c0_i32_0 : i32, i32
  }
  func.func @transform_7(%arg0: i32, %arg1: i32) -> (i32, i32) {
    %c0_i32 = arith.constant 0 : i32
    %c0_i32_0 = arith.constant 0 : i32
    %c0_i32_1 = arith.constant 0 : i32
    return %c0_i32, %c0_i32_0 : i32, i32
  }
  func.func @transform_8(%arg0: i32, %arg1: i32) -> (i32, i32) {
    %c0_i32 = arith.constant 0 : i32
    %c0_i32_0 = arith.constant 0 : i32
    %c0_i32_1 = arith.constant 0 : i32
    return %c0_i32, %c0_i32_0 : i32, i32
  }
  func.func @transform_9(%arg0: i32, %arg1: i32) -> (i32, i32) {
    %c0_i32 = arith.constant 0 : i32
    %c0_i32_0 = arith.constant 0 : i32
    %c0_i32_1 = arith.constant 0 : i32
    return %c0_i32, %c0_i32_0 : i32, i32
  }
  func.func @transform_10(%arg0: i32, %arg1: i32) -> (i32, i32, i32) {
    %c0_i32 = arith.constant 0 : i32
    %c0_i32_0 = arith.constant 0 : i32
    return %arg0, %arg1, %c0_i32 : i32, i32, i32
  }
}

</mosaic_0001>

<llo_original>
// kernel: tpu_custom_call.1
$region0: #{tpu_custom_call.1}
  #allocation0 [shape = 'u32[]', space=smem, size = 0x4, offset = 0x4, fixed_abs, tag = 'smem constant byte address 0x4 - core index']
  #allocation1 [shape = 'u32[72,128]{1,0:T(1,128)}', space=vmem, size = 0x9000, scoped, tag = 'internal scratch']
  #allocation2 [shape = 'bf16[16,128]{1,0:T(8,128)(2,1)}', space=vmem, size = 0x1000, scoped, tag = 'scratch operand']
  %s0 = inlined_call_operand.hbm [shape: f32[2,16,128], index: 0, kind: input, shape index: {}]
  %s1 = inlined_call_operand.hbm [shape: f32[2,16,128], index: 1, kind: input, shape index: {}]
  %s2 = inlined_call_operand.hbm [shape: bf16[128,128], index: 2, kind: input, shape index: {}]
  %s3 = inlined_call_operand.vmem [shape: f32[1,128], index: 3, kind: input, shape index: {}]
  %s4 = inlined_call_operand.hbm [shape: bf16[128,256], index: 4, kind: input, shape index: {}]
  %s5 = inlined_call_operand.vmem [shape: f32[1,256], index: 5, kind: input, shape index: {}]
  %s6 = inlined_call_operand.hbm [shape: bf16[128,128], index: 6, kind: input, shape index: {}]
  %s7 = inlined_call_operand.vmem [shape: f32[1,128], index: 7, kind: input, shape index: {}]
  %s8 = inlined_call_operand.vmem [shape: f32[1,128], index: 8, kind: input, shape index: {}]
  %s9 = inlined_call_operand.vmem [shape: f32[1,128], index: 9, kind: input, shape index: {}]
  %s10 = inlined_call_operand.hbm [shape: f32[2,16,128], index: 10, kind: output, shape index: {}]
  %s11 = sld [smem:[#allocation0]]
  $region93: #{tpu_custom_call.1} parent=0
    _
  %s13 = ssub.s32 1, %s11
  %s14 = scalar_select 0, %s13, %s11
  $region1: #{tpu_custom_call.1} parent=0
    #allocation3 [shape = 'u8[16384]{0}', space=vmem, size = 0x4000, scoped, tag = 'input window, operand 0']
    #allocation4 [shape = 's32[2]{0}', space=sflag, size = 0x8, scoped, tag = 'scoped memory for tpu_custom_call.1']
    #allocation5 [shape = 's32[2]{0}', space=sflag, size = 0x8, scoped, tag = 'scoped memory for tpu_custom_call.1']
    #allocation6 [shape = 'u8[16384]{0}', space=vmem, size = 0x4000, scoped, tag = 'input window, operand 1']
    #allocation7 [shape = 's32[2]{0}', space=sflag, size = 0x8, scoped, tag = 'scoped memory for tpu_custom_call.1']
    #allocation8 [shape = 'u8[32768]{0}', space=vmem, size = 0x8000, scoped, tag = 'input window, operand 2, single buffered']
    #allocation9 [shape = 'u8[65536]{0}', space=vmem, size = 0x10000, scoped, tag = 'input window, operand 4, single buffered']
    #allocation10 [shape = 's32[1]{0}', space=sflag, size = 0x4, scoped, tag = 'scoped memory for tpu_custom_call.1']
    #allocation11 [shape = 'u8[32768]{0}', space=vmem, size = 0x8000, scoped, tag = 'input window, operand 6, single buffered']
    #allocation12 [shape = 'u8[16384]{0}', space=vmem, size = 0x4000, scoped, tag = 'output window, operand 0']
    %15 = vsyncpa [#allocation4], 0
    %s16 = scalar_lea.sflag [#allocation4], 1
    %17 = vsyncpa %s16, 0
    %18 = vsyncpa [#allocation7], 0
    %s19 = scalar_lea.sflag [#allocation7], 1
    %20 = vsyncpa %s19, 0
    %21 = vsyncpa [#allocation10], 0
    %22 = vsyncpa [#allocation5], 0
    %s23 = scalar_lea.sflag [#allocation5], 1
    %24 = vsyncpa %s23, 0
    loop: start=0, step=1, limit=4
    $region2: #{tpu_custom_call.1} parent=1 // loop_pre_header
      _
    $region3: #{tpu_custom_call.1} parent=1 // loop_header
      %s26 = sphi 0, %s30
      %p27 = scmp.ge.s32.totalorder %s26, 4
      %s33 = sphi 0, %s45
      %s34 = sphi 0, %s41
      %s35 = sphi 0, %s33
      %s36 = sphi 0, %s34
      %s37 = sphi 0, %s35
      %s38 = sphi 0, %s36
      %s50 = sphi 0, %s52
      %s53 = sphi 0, %s50
      %s54 = sphi 0, %s53
      %s70 = sphi 0, %s54
      %s76 = sphi 0, %s78
      %s79 = sphi 0, %s76
      %s80 = sphi 0, %s79
      %s96 = sphi 0, %s80
      %s100 = sphi 0, %s100
      %s102 = sphi 0, %s100
      %s103 = sphi 0, %s102
      %s117 = sphi 0, %s103
      %s121 = sphi 0, %s121
      %s123 = sphi 0, %s121
      %s124 = sphi 0, %s123
      %s138 = sphi 0, %s124
      %s142 = sphi 0, %s142
      %s144 = sphi 0, %s142
      %s145 = sphi 0, %s144
      %s159 = sphi 0, %s145
      %s163 = sphi 0, %s163
      %s165 = sphi 0, %s163
      %s166 = sphi 0, %s165
      %s180 = sphi 0, %s166
      %s184 = sphi 0, %s184
      %s186 = sphi 0, %s184
      %s187 = sphi 0, %s186
      %s201 = sphi 0, %s187
      %s205 = sphi 0, %s205
      %s207 = sphi 0, %s205
      %s208 = sphi 0, %s207
      %s222 = sphi 0, %s208
      %s226 = sphi 0, %s226
      %s228 = sphi 0, %s226
      %s229 = sphi 0, %s228
      %s243 = sphi 0, %s229
      %s247 = sphi 0, %s247
      %s249 = sphi 0, %s247
      %s250 = sphi 0, %s249
      %s264 = sphi 0, %s250
      %s272 = sphi 0, %s274
      %s275 = sphi 0, %s272
      %s276 = sphi 0, %s275
      %s292 = sphi 0, %s276
    $region4: #{tpu_custom_call.1} parent=1 // loop_header_branch
      %29 = sbr.rel (%p27) target = $region8
    $region5: #{tpu_custom_call.1} parent=1 // loop_body
      %s31 = ssub.s32 %s26, 1
      %s32 = ssub.s32 %s26, 2
      %s39 = sadd.s32 1, %s34
      %p40 = scmp.ge.s32.totalorder %s39, 1
      %s41 = scalar_select %p40, 0, %s39
      %s42 = sadd.s32 1, %s33
      %s43 = scalar_select %p40, %s42, %s33
      %p44 = scmp.ge.s32.totalorder %s43, 2
      %s45 = scalar_select %p44, 0, %s43
      %s46 = ssub.s32 %s33, %s45
      %s47 = ssub.s32 %s34, %s41
      %s48 = sor.u32 %s46, %s47
      %p49 = scmp.eq.s32.totalorder %s48, 0
      %s51 = sadd.s32 %s50, 1
      %s52 = scalar_select %p49, %s50, %s51
      %p55 = pneg %p49
      %p56 = scmp.eq.s32.totalorder %s26, 1
      %p57 = por %p55, %p56
      %p58 = scmp.ne.s32.totalorder %s50, %s53
      %p59 = scmp.eq.s32.totalorder %s26, 0
      %p60 = por %p58, %p59
      %p61 = scmp.ne.s32.totalorder %s50, %s53
      %p62 = scmp.eq.s32.totalorder %s31, 1
      %p63 = por %p61, %p62
      %p64 = scmp.ne.s32.totalorder %s53, %s54
      %p65 = scmp.eq.s32.totalorder %s31, 0
      %p66 = por %p64, %p65
      %p67 = scmp.ne.s32.totalorder %s53, %s54
      %p68 = scmp.eq.s32.totalorder %s32, 1
      %p69 = por %p67, %p68
      %p71 = scmp.ne.s32.totalorder %s54, %s70
      %p72 = scmp.eq.s32.totalorder %s32, 0
      %p73 = por %p71, %p72
      %s74 = ssub.s32 %s33, %s45
      %p75 = scmp.eq.s32.totalorder %s74, 0
      %s77 = sadd.s32 %s76, 1
      %s78 = scalar_select %p75, %s76, %s77
      %p81 = pneg %p75
      %p82 = scmp.eq.s32.totalorder %s26, 1
      %p83 = por %p81, %p82
      %p84 = scmp.ne.s32.totalorder %s76, %s79
      %p85 = scmp.eq.s32.totalorder %s26, 0
      %p86 = por %p84, %p85
      %p87 = scmp.ne.s32.totalorder %s76, %s79
      %p88 = scmp.eq.s32.totalorder %s31, 1
      %p89 = por %p87, %p88
      %p90 = scmp.ne.s32.totalorder %s79, %s80
      %p91 = scmp.eq.s32.totalorder %s31, 0
      %p92 = por %p90, %p91
      %p93 = scmp.ne.s32.totalorder %s79, %s80
      %p94 = scmp.eq.s32.totalorder %s32, 1
      %p95 = por %p93, %p94
      %p97 = scmp.ne.s32.totalorder %s80, %s96
      %p98 = scmp.eq.s32.totalorder %s32, 0
      %p99 = por %p97, %p98
      %s101 = sadd.s32 %s100, 1
      %p104 = scmp.eq.s32.totalorder %s26, 1
      %p105 = scmp.ne.s32.totalorder %s100, %s102
      %p106 = scmp.eq.s32.totalorder %s26, 0
      %p107 = por %p105, %p106
      %p108 = scmp.ne.s32.totalorder %s100, %s102
      %p109 = scmp.eq.s32.totalorder %s31, 1
      %p110 = por %p108, %p109
      %p111 = scmp.ne.s32.totalorder %s102, %s103
      %p112 = scmp.eq.s32.totalorder %s31, 0
      %p113 = por %p111, %p112
      %p114 = scmp.ne.s32.totalorder %s102, %s103
      %p115 = scmp.eq.s32.totalorder %s32, 1
      %p116 = por %p114, %p115
      %p118 = scmp.ne.s32.totalorder %s103, %s117
      %p119 = scmp.eq.s32.totalorder %s32, 0
      %p120 = por %p118, %p119
      %s122 = sadd.s32 %s121, 1
      %p125 = scmp.eq.s32.totalorder %s26, 1
      %p126 = scmp.ne.s32.totalorder %s121, %s123
      %p127 = scmp.eq.s32.totalorder %s26, 0
      %p128 = por %p126, %p127
      %p129 = scmp.ne.s32.totalorder %s121, %s123
      %p130 = scmp.eq.s32.totalorder %s31, 1
      %p131 = por %p129, %p130
      %p132 = scmp.ne.s32.totalorder %s123, %s124
      %p133 = scmp.eq.s32.totalorder %s31, 0
      %p134 = por %p132, %p133
      %p135 = scmp.ne.s32.totalorder %s123, %s124
      %p136 = scmp.eq.s32.totalorder %s32, 1
      %p137 = por %p135, %p136
      %p139 = scmp.ne.s32.totalorder %s124, %s138
      %p140 = scmp.eq.s32.totalorder %s32, 0
      %p141 = por %p139, %p140
      %s143 = sadd.s32 %s142, 1
      %p146 = scmp.eq.s32.totalorder %s26, 1
      %p147 = scmp.ne.s32.totalorder %s142, %s144
      %p148 = scmp.eq.s32.totalorder %s26, 0
      %p149 = por %p147, %p148
      %p150 = scmp.ne.s32.totalorder %s142, %s144
      %p151 = scmp.eq.s32.totalorder %s31, 1
      %p152 = por %p150, %p151
      %p153 = scmp.ne.s32.totalorder %s144, %s145
      %p154 = scmp.eq.s32.totalorder %s31, 0
      %p155 = por %p153, %p154
      %p156 = scmp.ne.s32.totalorder %s144, %s145
      %p157 = scmp.eq.s32.totalorder %s32, 1
      %p158 = por %p156, %p157
      %p160 = scmp.ne.s32.totalorder %s145, %s159
      %p161 = scmp.eq.s32.totalorder %s32, 0
      %p162 = por %p160, %p161
      %s164 = sadd.s32 %s163, 1
      %p167 = scmp.eq.s32.totalorder %s26, 1
      %p168 = scmp.ne.s32.totalorder %s163, %s165
      %p169 = scmp.eq.s32.totalorder %s26, 0
      %p170 = por %p168, %p169
      %p171 = scmp.ne.s32.totalorder %s163, %s165
      %p172 = scmp.eq.s32.totalorder %s31, 1
      %p173 = por %p171, %p172
      %p174 = scmp.ne.s32.totalorder %s165, %s166
      %p175 = scmp.eq.s32.totalorder %s31, 0
      %p176 = por %p174, %p175
      %p177 = scmp.ne.s32.totalorder %s165, %s166
      %p178 = scmp.eq.s32.totalorder %s32, 1
      %p179 = por %p177, %p178
      %p181 = scmp.ne.s32.totalorder %s166, %s180
      %p182 = scmp.eq.s32.totalorder %s32, 0
      %p183 = por %p181, %p182
      %s185 = sadd.s32 %s184, 1
      %p188 = scmp.eq.s32.totalorder %s26, 1
      %p189 = scmp.ne.s32.totalorder %s184, %s186
      %p190 = scmp.eq.s32.totalorder %s26, 0
      %p191 = por %p189, %p190
      %p192 = scmp.ne.s32.totalorder %s184, %s186
      %p193 = scmp.eq.s32.totalorder %s31, 1
      %p194 = por %p192, %p193
      %p195 = scmp.ne.s32.totalorder %s186, %s187
      %p196 = scmp.eq.s32.totalorder %s31, 0
      %p197 = por %p195, %p196
      %p198 = scmp.ne.s32.totalorder %s186, %s187
      %p199 = scmp.eq.s32.totalorder %s32, 1
      %p200 = por %p198, %p199
      %p202 = scmp.ne.s32.totalorder %s187, %s201
      %p203 = scmp.eq.s32.totalorder %s32, 0
      %p204 = por %p202, %p203
      %s206 = sadd.s32 %s205, 1
      %p209 = scmp.eq.s32.totalorder %s26, 1
      %p210 = scmp.ne.s32.totalorder %s205, %s207
      %p211 = scmp.eq.s32.totalorder %s26, 0
      %p212 = por %p210, %p211
      %p213 = scmp.ne.s32.totalorder %s205, %s207
      %p214 = scmp.eq.s32.totalorder %s31, 1
      %p215 = por %p213, %p214
      %p216 = scmp.ne.s32.totalorder %s207, %s208
      %p217 = scmp.eq.s32.totalorder %s31, 0
      %p218 = por %p216, %p217
      %p219 = scmp.ne.s32.totalorder %s207, %s208
      %p220 = scmp.eq.s32.totalorder %s32, 1
      %p221 = por %p219, %p220
      %p223 = scmp.ne.s32.totalorder %s208, %s222
      %p224 = scmp.eq.s32.totalorder %s32, 0
      %p225 = por %p223, %p224
      %s227 = sadd.s32 %s226, 1
      %p230 = scmp.eq.s32.totalorder %s26, 1
      %p231 = scmp.ne.s32.totalorder %s226, %s228
      %p232 = scmp.eq.s32.totalorder %s26, 0
      %p233 = por %p231, %p232
      %p234 = scmp.ne.s32.totalorder %s226, %s228
      %p235 = scmp.eq.s32.totalorder %s31, 1
      %p236 = por %p234, %p235
      %p237 = scmp.ne.s32.totalorder %s228, %s229
      %p238 = scmp.eq.s32.totalorder %s31, 0
      %p239 = por %p237, %p238
      %p240 = scmp.ne.s32.totalorder %s228, %s229
      %p241 = scmp.eq.s32.totalorder %s32, 1
      %p242 = por %p240, %p241
      %p244 = scmp.ne.s32.totalorder %s229, %s243
      %p245 = scmp.eq.s32.totalorder %s32, 0
      %p246 = por %p244, %p245
      %s248 = sadd.s32 %s247, 1
      %p251 = scmp.eq.s32.totalorder %s26, 1
      %p252 = scmp.ne.s32.totalorder %s247, %s249
      %p253 = scmp.eq.s32.totalorder %s26, 0
      %p254 = por %p252, %p253
      %p255 = scmp.ne.s32.totalorder %s247, %s249
      %p256 = scmp.eq.s32.totalorder %s31, 1
      %p257 = por %p255, %p256
      %p258 = scmp.ne.s32.totalorder %s249, %s250
      %p259 = scmp.eq.s32.totalorder %s31, 0
      %p260 = por %p258, %p259
      %p261 = scmp.ne.s32.totalorder %s249, %s250
      %p262 = scmp.eq.s32.totalorder %s32, 1
      %p263 = por %p261, %p262
      %p265 = scmp.ne.s32.totalorder %s250, %s264
      %p266 = scmp.eq.s32.totalorder %s32, 0
      %p267 = por %p265, %p266
      %s268 = ssub.s32 %s33, %s45
      %s269 = ssub.s32 %s34, %s41
      %s270 = sor.u32 %s268, %s269
      %p271 = scmp.eq.s32.totalorder %s270, 0
      %s273 = sadd.s32 %s272, 1
      %s274 = scalar_select %p271, %s272, %s273
      %p277 = pneg %p271
      %p278 = scmp.eq.s32.totalorder %s26, 1
      %p279 = por %p277, %p278
      %p280 = scmp.ne.s32.totalorder %s272, %s275
      %p281 = scmp.eq.s32.totalorder %s26, 0
      %p282 = por %p280, %p281
      %p283 = scmp.ne.s32.totalorder %s272, %s275
      %p284 = scmp.eq.s32.totalorder %s31, 1
      %p285 = por %p283, %p284
      %p286 = scmp.ne.s32.totalorder %s275, %s276
      %p287 = scmp.eq.s32.totalorder %s31, 0
      %p288 = por %p286, %p287
      %p289 = scmp.ne.s32.totalorder %s275, %s276
      %p290 = scmp.eq.s32.totalorder %s32, 1
      %p291 = por %p289, %p290
      %p293 = scmp.ne.s32.totalorder %s276, %s292
      %p294 = scmp.eq.s32.totalorder %s32, 0
      %p295 = por %p293, %p294
      %p296 = scmp.le.s32.totalorder 1, %s26
      %p297 = scmp.lt.s32.totalorder %s26, 3
      %p298 = pnand %p296, %p297
      %p299 = pneg %p298
      // Predicated region
      $region9: #{tpu_custom_call.1} parent=5 // pred_check
        _
      $region10: #{tpu_custom_call.1} parent=5 // pred_check_branch
        %301 = sbr.rel (%p298) target = $region12
      $region11: #{tpu_custom_call.1} parent=5 // pred_region
        %s302 = ssub.s32 %s26, 1
        // Predicated region
        $region13: #{tpu_custom_call.1} parent=11 // pred_check
          %p303 = pneg %p113
        $region14: #{tpu_custom_call.1} parent=11 // pred_check_branch
          %305 = sbr.rel (%p303) target = $region16
        $region15: #{tpu_custom_call.1} parent=11 // pred_region
          %307 = vsyncadd [#allocation7], 0
          %s308 = sshll.u32 %s2, 4
          %s309 = int_to_ptr.hbm [resolvable:$true] %s308
          %s310 = sshll.u32 [#allocation8], 4
          %s311 = int_to_ptr.vmem [resolvable:$true] %s310
          %316 = dma.hbm_to_vmem [thread:$0]  %s309, 1024, %s311, [#allocation7], 64, 64, 4
        $region16: #{tpu_custom_call.1} parent=11 // pred_fallthru
          _
        // Predicated region
        $region17: #{tpu_custom_call.1} parent=11 // pred_check
          %p317 = pneg %p134
        $region18: #{tpu_custom_call.1} parent=11 // pred_check_branch
          %319 = sbr.rel (%p317) target = $region20
        $region19: #{tpu_custom_call.1} parent=11 // pred_region
          _
        $region20: #{tpu_custom_call.1} parent=11 // pred_fallthru
          _
        // Predicated region
        $region21: #{tpu_custom_call.1} parent=11 // pred_check
          %p320 = pneg %p155
        $region22: #{tpu_custom_call.1} parent=11 // pred_check_branch
          %322 = sbr.rel (%p320) target = $region24
        $region23: #{tpu_custom_call.1} parent=11 // pred_region
          %324 = vsyncadd [#allocation10], 0
          %s325 = sshll.u32 %s4, 4
          %s326 = int_to_ptr.hbm [resolvable:$true] %s325
          %s327 = sshll.u32 [#allocation9], 4
          %s328 = int_to_ptr.vmem [resolvable:$true] %s327
          %333 = dma.hbm_to_vmem [thread:$0]  %s326, 2048, %s328, [#allocation10], 128, 128, 8
        $region24: #{tpu_custom_call.1} parent=11 // pred_fallthru
          _
        // Predicated region
        $region25: #{tpu_custom_call.1} parent=11 // pred_check
          %p334 = pneg %p176
        $region26: #{tpu_custom_call.1} parent=11 // pred_check_branch
          %336 = sbr.rel (%p334) target = $region28
        $region27: #{tpu_custom_call.1} parent=11 // pred_region
          _
        $region28: #{tpu_custom_call.1} parent=11 // pred_fallthru
          _
        // Predicated region
        $region29: #{tpu_custom_call.1} parent=11 // pred_check
          %p337 = pneg %p197
        $region30: #{tpu_custom_call.1} parent=11 // pred_check_branch
          %339 = sbr.rel (%p337) target = $region32
        $region31: #{tpu_custom_call.1} parent=11 // pred_region
          %341 = vsyncadd [#allocation10], 0
          %s342 = sshll.u32 %s6, 4
          %s343 = int_to_ptr.hbm [resolvable:$true] %s342
          %s344 = sshll.u32 [#allocation11], 4
          %s345 = int_to_ptr.vmem [resolvable:$true] %s344
          %350 = dma.hbm_to_vmem [thread:$0]  %s343, 1024, %s345, [#allocation10], 64, 64, 4
        $region32: #{tpu_custom_call.1} parent=11 // pred_fallthru
          _
        // Predicated region
        $region33: #{tpu_custom_call.1} parent=11 // pred_check
          %p351 = pneg %p218
        $region34: #{tpu_custom_call.1} parent=11 // pred_check_branch
          %353 = sbr.rel (%p351) target = $region36
        $region35: #{tpu_custom_call.1} parent=11 // pred_region
          _
        $region36: #{tpu_custom_call.1} parent=11 // pred_fallthru
          _
        // Predicated region
        $region37: #{tpu_custom_call.1} parent=11 // pred_check
          %p354 = pneg %p239
        $region38: #{tpu_custom_call.1} parent=11 // pred_check_branch
          %356 = sbr.rel (%p354) target = $region40
        $region39: #{tpu_custom_call.1} parent=11 // pred_region
          _
        $region40: #{tpu_custom_call.1} parent=11 // pred_fallthru
          _
        // Predicated region
        $region41: #{tpu_custom_call.1} parent=11 // pred_check
          %p357 = pneg %p260
        $region42: #{tpu_custom_call.1} parent=11 // pred_check_branch
          %359 = sbr.rel (%p357) target = $region44
        $region43: #{tpu_custom_call.1} parent=11 // pred_region
          _
        $region44: #{tpu_custom_call.1} parent=11 // pred_fallthru
          _
      $region12: #{tpu_custom_call.1} parent=5 // pred_fallthru
        _
      %p360 = scmp.lt.s32.totalorder %s26, 2
      // Predicated region
      $region45: #{tpu_custom_call.1} parent=5 // pred_check
        %p361 = pneg %p360
      $region46: #{tpu_custom_call.1} parent=5 // pred_check_branch
        %363 = sbr.rel (%p361) target = $region48
      $region47: #{tpu_custom_call.1} parent=5 // pred_region
        // Predicated region
        $region49: #{tpu_custom_call.1} parent=47 // pred_check
          %p364 = pneg %p60
        $region50: #{tpu_custom_call.1} parent=47 // pred_check_branch
          %366 = sbr.rel (%p364) target = $region52
        $region51: #{tpu_custom_call.1} parent=47 // pred_region
          %s367 = sand.u32 %s50, 1
          %s368 = scalar_lea.sflag [#allocation4], %s367
          %s369 = sand.u32 %s50, 1
          %s370 = smul.addr %s369, 16
          %s371 = scalar_lea.vmem [#allocation3], %s370
          %s372 = smul.u32 2, %s34
          %374 = vsyncadd %s368, 0
          %s375 = smul.addr %s33, 2
          %s376 = sadd.s32 %s372, %s375
          %s377 = smul.addr %s376, 8
          %s378 = scalar_lea.hbm %s0, %s377
          %s379 = sshll.u32 %s378, 4
          %s380 = int_to_ptr.hbm [resolvable:$true] %s379
          %s381 = sshll.u32 %s371, 4
          %s382 = int_to_ptr.vmem [resolvable:$true] %s381
          %387 = dma.hbm_to_vmem [thread:$0]  %s380, 256, %s382, %s368, 128, 128, 8
        $region52: #{tpu_custom_call.1} parent=47 // pred_fallthru
          _
        // Predicated region
        $region53: #{tpu_custom_call.1} parent=47 // pred_check
          %p388 = pneg %p86
        $region54: #{tpu_custom_call.1} parent=47 // pred_check_branch
          %390 = sbr.rel (%p388) target = $region56
        $region55: #{tpu_custom_call.1} parent=47 // pred_region
          %s391 = sand.u32 %s26, 1
          %s392 = scalar_lea.sflag [#allocation7], %s391
          %s393 = sand.u32 %s76, 1
          %s394 = smul.addr %s393, 16
          %s395 = scalar_lea.vmem [#allocation6], %s394
          %397 = vsyncadd %s392, 0
          %s398 = smul.addr %s33, 2
          %s399 = smul.addr %s398, 8
          %s400 = scalar_lea.hbm %s1, %s399
          %s401 = sshll.u32 %s400, 4
          %s402 = int_to_ptr.hbm [resolvable:$true] %s401
          %s403 = sshll.u32 %s395, 4
          %s404 = int_to_ptr.vmem [resolvable:$true] %s403
          %409 = dma.hbm_to_vmem [thread:$0]  %s402, 256, %s404, %s392, 128, 128, 8
        $region56: #{tpu_custom_call.1} parent=47 // pred_fallthru
          _
      $region48: #{tpu_custom_call.1} parent=5 // pred_fallthru
        _
      %p410 = scmp.le.s32.totalorder 1, %s26
      %p411 = scmp.lt.s32.totalorder %s26, 3
      %p412 = pnand %p410, %p411
      %p413 = pneg %p412
      // Predicated region
      $region57: #{tpu_custom_call.1} parent=5 // pred_check
        _
      $region58: #{tpu_custom_call.1} parent=5 // pred_check_branch
        %415 = sbr.rel (%p412) target = $region60
      $region59: #{tpu_custom_call.1} parent=5 // pred_region
        %s416 = ssub.s32 %s26, 1
        %s417 = sand.u32 %s53, 1
        %s418 = scalar_lea.sflag [#allocation4], %s417
        %s419 = sand.u32 %s53, 1
        %s420 = smul.addr %s419, 16
        %s421 = scalar_lea.vmem [#allocation3], %s420
        // Predicated region
        $region61: #{tpu_custom_call.1} parent=59 // pred_check
          %p422 = pneg %p66
        $region62: #{tpu_custom_call.1} parent=59 // pred_check_branch
          %424 = sbr.rel (%p422) target = $region64
        $region63: #{tpu_custom_call.1} parent=59 // pred_region
          %426 = dma.done %s418, 256
        $region64: #{tpu_custom_call.1} parent=59 // pred_fallthru
          _
        %s427 = sand.u32 %s31, 1
        %s428 = scalar_lea.sflag [#allocation7], %s427
        %s429 = sand.u32 %s79, 1
        %s430 = smul.addr %s429, 16
        %s431 = scalar_lea.vmem [#allocation6], %s430
        // Predicated region
        $region65: #{tpu_custom_call.1} parent=59 // pred_check
          %p432 = pneg %p92
        $region66: #{tpu_custom_call.1} parent=59 // pred_check_branch
          %434 = sbr.rel (%p432) target = $region68
        $region67: #{tpu_custom_call.1} parent=59 // pred_region
          %436 = dma.done %s428, 256
        $region68: #{tpu_custom_call.1} parent=59 // pred_fallthru
          _
        // Predicated region
        $region69: #{tpu_custom_call.1} parent=59 // pred_check
          %p437 = pneg %p113
        $region70: #{tpu_custom_call.1} parent=59 // pred_check_branch
          %439 = sbr.rel (%p437) target = $region72
        $region71: #{tpu_custom_call.1} parent=59 // pred_region
          %441 = dma.done [#allocation7], 1024
        $region72: #{tpu_custom_call.1} parent=59 // pred_fallthru
          _
        // Predicated region
        $region73: #{tpu_custom_call.1} parent=59 // pred_check
          %p442 = pneg %p155
        $region74: #{tpu_custom_call.1} parent=59 // pred_check_branch
          %444 = sbr.rel (%p442) target = $region76
        $region75: #{tpu_custom_call.1} parent=59 // pred_region
          %446 = dma.done [#allocation10], 2048
        $region76: #{tpu_custom_call.1} parent=59 // pred_fallthru
          _
        // Predicated region
        $region77: #{tpu_custom_call.1} parent=59 // pred_check
          %p447 = pneg %p197
        $region78: #{tpu_custom_call.1} parent=59 // pred_check_branch
          %449 = sbr.rel (%p447) target = $region80
        $region79: #{tpu_custom_call.1} parent=59 // pred_region
          %451 = dma.done [#allocation10], 1024
        $region80: #{tpu_custom_call.1} parent=59 // pred_fallthru
          _
        %s452 = sand.u32 %s53, 1
        %s453 = scalar_lea.sflag [#allocation4], %s452
        %s454 = sand.u32 %s53, 1
        %s455 = smul.addr %s454, 16
        %s456 = scalar_lea.vmem [#allocation3], %s455
        %p457 = pneg %p66
        %p458 = pneg %p63
        %s459 = sand.u32 %s31, 1
        %s460 = scalar_lea.sflag [#allocation7], %s459
        %s461 = sand.u32 %s79, 1
        %s462 = smul.addr %s461, 16
        %s463 = scalar_lea.vmem [#allocation6], %s462
        %p464 = pneg %p92
        %p465 = pneg %p89
        %p466 = pneg %p113
        %p467 = pneg %p110
        %p468 = pneg %p134
        %p469 = pneg %p131
        %p470 = pneg %p155
        %p471 = pneg %p152
        %p472 = pneg %p176
        %p473 = pneg %p173
        %p474 = pneg %p197
        %p475 = pneg %p194
        %p476 = pneg %p218
        %p477 = pneg %p215
        %p478 = pneg %p239
        %p479 = pneg %p236
        %p480 = pneg %p260
        %p481 = pneg %p257
        %p482 = pneg %p288
        %p483 = pneg %p285
        %s484 = sand.u32 %s275, 1
        %s485 = scalar_lea.sflag [#allocation5], %s484
        %s486 = sand.u32 %s275, 1
        %s487 = smul.addr %s486, 16
        %s488 = scalar_lea.vmem [#allocation12], %s487
        %s489 = smul.u32 2, %s36
        %s490 = smul.u32 2, %s36
        %v492 = vld [vmem:[%s421] sm:$0xff]
        %v493 = vld [vmem:[%s421 + $0x8] sm:$0xff]
        %v494 = vpack.c.bf16 %v493, %v492
        %v495 = vld [vmem:[%s431] sm:$0xff]
        %v496 = vld [vmem:[%s431 + $0x8] sm:$0xff]
        %v497 = vpack.c.bf16 %v496, %v495
        %v498 = vld [vmem:[#allocation8] sm:$0xf]
        %v499 = vld [vmem:[#allocation8 + $0x4] sm:$0xf]
        %v500 = vld [vmem:[#allocation8 + $0x8] sm:$0xf]
        %v501 = vld [vmem:[#allocation8 + $0xc] sm:$0xf]
        %v502 = vld [vmem:[#allocation8 + $0x10] sm:$0xf]
        %v503 = vld [vmem:[#allocation8 + $0x14] sm:$0xf]
        %v504 = vld [vmem:[#allocation8 + $0x18] sm:$0xf]
        %v505 = vld [vmem:[#allocation8 + $0x1c] sm:$0xf]
        %v506 = vld [vmem:[#allocation8 + $0x20] sm:$0xf]
        %v507 = vld [vmem:[#allocation8 + $0x24] sm:$0xf]
        %v508 = vld [vmem:[#allocation8 + $0x28] sm:$0xf]
        %v509 = vld [vmem:[#allocation8 + $0x2c] sm:$0xf]
        %v510 = vld [vmem:[#allocation8 + $0x30] sm:$0xf]
        %v511 = vld [vmem:[#allocation8 + $0x34] sm:$0xf]
        %v512 = vld [vmem:[#allocation8 + $0x38] sm:$0xf]
        %v513 = vld [vmem:[#allocation8 + $0x3c] sm:$0xf]
        %v514 = vld [vmem:[%s3] sm:$0x1]
        %v516 = vperm.slane %v514, 0
        %v534 = vunpack.c.l.b16 %v498
        %v535 = vunpack.c.l.b16 %v499
        %v536 = vunpack.c.l.b16 %v500
        %v537 = vunpack.c.l.b16 %v501
        %v538 = vunpack.c.l.b16 %v502
        %v539 = vunpack.c.l.b16 %v503
        %v540 = vunpack.c.l.b16 %v504
        %v541 = vunpack.c.l.b16 %v505
        %v542 = vunpack.c.l.b16 %v506
        %v543 = vunpack.c.l.b16 %v507
        %v544 = vunpack.c.l.b16 %v508
        %v545 = vunpack.c.l.b16 %v509
        %v546 = vunpack.c.l.b16 %v510
        %v547 = vunpack.c.l.b16 %v511
        %v548 = vunpack.c.l.b16 %v512
        %v549 = vunpack.c.l.b16 %v513
        %v550 = vpack.c.b16 %v535, %v534
        %v551 = vpack.c.b16 %v537, %v536
        %v552 = vpack.c.b16 %v539, %v538
        %v553 = vpack.c.b16 %v541, %v540
        %v554 = vpack.c.b16 %v543, %v542
        %v555 = vpack.c.b16 %v545, %v544
        %v556 = vpack.c.b16 %v547, %v546
        %v557 = vpack.c.b16 %v549, %v548
        %566 = vmatpush.bf16.msra.mxu0 %v557
        %567 = vmatpush.bf16.msra.mxu0 %v556
        %568 = vmatpush.bf16.msra.mxu0 %v555
        %569 = vmatpush.bf16.msra.mxu0 %v554
        %570 = vmatpush.bf16.msra.mxu0 %v553
        %571 = vmatpush.bf16.msra.mxu0 %v552
        %572 = vmatpush.bf16.msra.mxu0 %v551
        %573 = vmatpush.bf16.msra.mxu0 %v550
        %574 = vmatmul.bf16.gmra.mxu0 %v494
        %v575 = vpop.f32.mrf.mxu0
        %v576 = vadd.f32 %v516, %v575
        %v577 = vpop.f32.mrf.mxu0
        %v578 = vadd.f32 %v516, %v577
        %579 = vdwg.mxu0
        %v580 = vld [vmem:[#allocation9] sm:$0xff]
        %v581 = vld [vmem:[#allocation9 + $0x8] sm:$0xff]
        %v582 = vld [vmem:[#allocation9 + $0x10] sm:$0xff]
        %v583 = vld [vmem:[#allocation9 + $0x18] sm:$0xff]
        %v584 = vld [vmem:[#allocation9 + $0x20] sm:$0xff]
        %v585 = vld [vmem:[#allocation9 + $0x28] sm:$0xff]
        %v586 = vld [vmem:[#allocation9 + $0x30] sm:$0xff]
        %v587 = vld [vmem:[#allocation9 + $0x38] sm:$0xff]
        %v588 = vld [vmem:[#allocation9 + $0x40] sm:$0xff]
        %v589 = vld [vmem:[#allocation9 + $0x48] sm:$0xff]
        %v590 = vld [vmem:[#allocation9 + $0x50] sm:$0xff]
        %v591 = vld [vmem:[#allocation9 + $0x58] sm:$0xff]
        %v592 = vld [vmem:[#allocation9 + $0x60] sm:$0xff]
        %v593 = vld [vmem:[#allocation9 + $0x68] sm:$0xff]
        %v594 = vld [vmem:[#allocation9 + $0x70] sm:$0xff]
        %v595 = vld [vmem:[#allocation9 + $0x78] sm:$0xff]
        %v596 = vld [vmem:[%s5] sm:$0x3]
        %v598 = vperm.slane %v596, 0
        %v599 = vperm.slane %v596, 1
        %v618 = vunpack.c.l.b16 %v580
        %v619 = vunpack.c.h.b16 %v580
        %v620 = vunpack.c.l.b16 %v581
        %v621 = vunpack.c.h.b16 %v581
        %v622 = vunpack.c.l.b16 %v582
        %v623 = vunpack.c.h.b16 %v582
        %v624 = vunpack.c.l.b16 %v583
        %v625 = vunpack.c.h.b16 %v583
        %v626 = vunpack.c.l.b16 %v584
        %v627 = vunpack.c.h.b16 %v584
        %v628 = vunpack.c.l.b16 %v585
        %v629 = vunpack.c.h.b16 %v585
        %v630 = vunpack.c.l.b16 %v586
        %v631 = vunpack.c.h.b16 %v586
        %v632 = vunpack.c.l.b16 %v587
        %v633 = vunpack.c.h.b16 %v587
        %v634 = vunpack.c.l.b16 %v588
        %v635 = vunpack.c.h.b16 %v588
        %v636 = vunpack.c.l.b16 %v589
        %v637 = vunpack.c.h.b16 %v589
        %v638 = vunpack.c.l.b16 %v590
        %v639 = vunpack.c.h.b16 %v590
        %v640 = vunpack.c.l.b16 %v591
        %v641 = vunpack.c.h.b16 %v591
        %v642 = vunpack.c.l.b16 %v592
        %v643 = vunpack.c.h.b16 %v592
        %v644 = vunpack.c.l.b16 %v593
        %v645 = vunpack.c.h.b16 %v593
        %v646 = vunpack.c.l.b16 %v594
        %v647 = vunpack.c.h.b16 %v594
        %v648 = vunpack.c.l.b16 %v595
        %v649 = vunpack.c.h.b16 %v595
        %v650 = vpack.c.b16 %v620, %v618
        %v651 = vpack.c.b16 %v621, %v619
        %v652 = vpack.c.b16 %v624, %v622
        %v653 = vpack.c.b16 %v625, %v623
        %v654 = vpack.c.b16 %v628, %v626
        %v655 = vpack.c.b16 %v629, %v627
        %v656 = vpack.c.b16 %v632, %v630
        %v657 = vpack.c.b16 %v633, %v631
        %v658 = vpack.c.b16 %v636, %v634
        %v659 = vpack.c.b16 %v637, %v635
        %v660 = vpack.c.b16 %v640, %v638
        %v661 = vpack.c.b16 %v641, %v639
        %v662 = vpack.c.b16 %v644, %v642
        %v663 = vpack.c.b16 %v645, %v643
        %v664 = vpack.c.b16 %v648, %v646
        %v665 = vpack.c.b16 %v649, %v647
        %682 = vmatpush.bf16.msra.mxu0 %v664
        %683 = vmatpush.bf16.msra.mxu0 %v662
        %684 = vmatpush.bf16.msra.mxu0 %v660
        %685 = vmatpush.bf16.msra.mxu0 %v658
        %686 = vmatpush.bf16.msra.mxu0 %v656
        %687 = vmatpush.bf16.msra.mxu0 %v654
        %688 = vmatpush.bf16.msra.mxu0 %v652
        %689 = vmatpush.bf16.msra.mxu0 %v650
        %690 = vmatmul.bf16.gmra.mxu0 %v497
        %v691 = vpop.f32.mrf.mxu0
        %v692 = vadd.f32 %v598, %v691
        %v693 = vpop.f32.mrf.mxu0
        %v694 = vadd.f32 %v598, %v693
        %695 = vdwg.mxu0
        %696 = vmatpush.bf16.msra.mxu0 %v665
        %697 = vmatpush.bf16.msra.mxu0 %v663
        %698 = vmatpush.bf16.msra.mxu0 %v661
        %699 = vmatpush.bf16.msra.mxu0 %v659
        %700 = vmatpush.bf16.msra.mxu0 %v657
        %701 = vmatpush.bf16.msra.mxu0 %v655
        %702 = vmatpush.bf16.msra.mxu0 %v653
        %703 = vmatpush.bf16.msra.mxu0 %v651
        %704 = vmatmul.bf16.gmra.mxu0 %v497
        %v705 = vpop.f32.mrf.mxu0
        %v706 = vadd.f32 %v599, %v705
        %v707 = vpop.f32.mrf.mxu0
        %v708 = vadd.f32 %v599, %v707
        %709 = vdwg.mxu0
        %v710 = vpack.c.bf16 %v578, %v576
        %v711 = vpack.c.bf16 %v694, %v692
        %v712 = vpack.c.bf16 %v708, %v706
        %vm713 = vcmask 261120
        %v715 = vsel %vm713, %v710, 0
        %v718 = vsel %vm713, %v711, 0
        %720 = vmatpush.bf16.xpose.msra.mxu0 0
        %721 = vmatpush.bf16.xpose.msra.mxu0 0
        %722 = vmatpush.bf16.xpose.msra.mxu0 0
        %723 = vmatpush.bf16.xpose.msra.mxu0 0
        %724 = vmatpush.bf16.xpose.msra.mxu0 0
        %725 = vmatpush.bf16.xpose.msra.mxu0 0
        %726 = vmatpush.bf16.xpose.msra.mxu0 0
        %727 = vmatpush.bf16.xpose.msra.mxu0 %v718
        %728 = vmatmul.bf16.gmra.mxu0 %v715
        %v729 = vpop.f32.mrf.mxu0
        %v730 = vadd.f32 0.0, %v729
        %v731 = vpop.f32.mrf.mxu0
        %v732 = vadd.f32 0.0, %v731
        %733 = vdwg.mxu0
        %v734 = vmul.f32 %v730, 0.17677669
        %v735 = vmul.f32 %v732, 0.17677669
        %vm736 = vcmask 130048
        %v737 = vsel %vm736, %v734, -inf
        %738 = vmax.xlane.f32.xlu0 %v737
        %v739 = vpop.xlane.xlu0 %738
        %v740 = vsel %vm736, %v735, -inf
        %741 = vmax.xlane.f32.xlu0 %v740
        %v742 = vpop.xlane.xlu0 %741
        %v743 = vsub.f32 %v734, %v739
        %v744 = vsub.f32 %v735, %v742
        %v745 = vmul.f32 %v743, 1.442695
        %v746 = vpow.pop %v745
        %v747 = vmul.f32 %v744, 1.442695
        %v748 = vpow.pop %v747
        %v749 = vsel %vm736, %v746, 0.0
        %750 = vadd.xlane.f32.xlu0 %v749
        %v751 = vpop.xlane.xlu0 %750
        %v752 = vsel %vm736, %v748, 0.0
        %753 = vadd.xlane.f32.xlu0 %v752
        %v754 = vpop.xlane.xlu0 %753
        %v755 = vrcp.pop %v751
        %v756 = vrcp.pop %v754
        %v757 = vmul.f32 %v746, %v755
        %v758 = vmul.f32 %v748, %v756
        %v759 = vpack.c.bf16 %v758, %v757
        %v761 = vsel %vm736, %v759, 0
        %763 = vmatpush.bf16.msra.mxu0 0
        %764 = vmatpush.bf16.msra.mxu0 0
        %765 = vmatpush.bf16.msra.mxu0 0
        %766 = vmatpush.bf16.msra.mxu0 0
        %767 = vmatpush.bf16.msra.mxu0 0
        %768 = vmatpush.bf16.msra.mxu0 0
        %769 = vmatpush.bf16.msra.mxu0 0
        %770 = vmatpush.bf16.msra.mxu0 %v712
        %771 = vmatmul.bf16.gmra.mxu0 %v761
        %v772 = vpop.f32.mrf.mxu0
        %v773 = vadd.f32 0.0, %v772
        %v774 = vpop.f32.mrf.mxu0
        %v775 = vadd.f32 0.0, %v774
        %776 = vdwg.mxu0
        %v777 = vpack.c.bf16 %v773, %v773
        %v778 = vpack.c.bf16 %v775, %v775
        %vm779 = vcmask 257024
        %780 = vst.msk [vmem:[#allocation2] sm:$0xf] %vm779, %v777
        %781 = vst.msk [vmem:[#allocation2 + $0x4] sm:$0xf] %vm779, %v778
        %783 = vrot.lane.b32.xlu0 %v710, 96
        %v784 = vpop.permute.xlu0 %783
        %786 = vrot.lane.b32.xlu0 %v711, 96
        %v787 = vpop.permute.xlu0 %786
        %v789 = vsel %vm713, %v784, 0
        %v792 = vsel %vm713, %v787, 0
        %794 = vmatpush.bf16.xpose.msra.mxu0 0
        %795 = vmatpush.bf16.xpose.msra.mxu0 0
        %796 = vmatpush.bf16.xpose.msra.mxu0 0
        %797 = vmatpush.bf16.xpose.msra.mxu0 0
        %798 = vmatpush.bf16.xpose.msra.mxu0 0
        %799 = vmatpush.bf16.xpose.msra.mxu0 0
        %800 = vmatpush.bf16.xpose.msra.mxu0 0
        %801 = vmatpush.bf16.xpose.msra.mxu0 %v792
        %802 = vmatmul.bf16.gmra.mxu0 %v789
        %v803 = vpop.f32.mrf.mxu0
        %v804 = vadd.f32 0.0, %v803
        %v805 = vpop.f32.mrf.mxu0
        %v806 = vadd.f32 0.0, %v805
        %807 = vdwg.mxu0
        %v808 = vmul.f32 %v804, 0.17677669
        %v809 = vmul.f32 %v806, 0.17677669
        %v810 = vsel %vm736, %v808, -inf
        %811 = vmax.xlane.f32.xlu0 %v810
        %v812 = vpop.xlane.xlu0 %811
        %v813 = vsel %vm736, %v809, -inf
        %814 = vmax.xlane.f32.xlu0 %v813
        %v815 = vpop.xlane.xlu0 %814
        %v816 = vsub.f32 %v808, %v812
        %v817 = vsub.f32 %v809, %v815
        %v818 = vmul.f32 %v816, 1.442695
        %v819 = vpow.pop %v818
        %v820 = vmul.f32 %v817, 1.442695
        %v821 = vpow.pop %v820
        %v822 = vsel %vm736, %v819, 0.0
        %823 = vadd.xlane.f32.xlu0 %v822
        %v824 = vpop.xlane.xlu0 %823
        %v825 = vsel %vm736, %v821, 0.0
        %826 = vadd.xlane.f32.xlu0 %v825
        %v827 = vpop.xlane.xlu0 %826
        %v828 = vrcp.pop %v824
        %v829 = vrcp.pop %v827
        %v830 = vmul.f32 %v819, %v828
        %v831 = vmul.f32 %v821, %v829
        %v832 = vpack.c.bf16 %v831, %v830
        %834 = vrot.lane.b32.xlu0 %v712, 96
        %v835 = vpop.permute.xlu0 %834
        %v838 = vsel %vm736, %v832, 0
        %840 = vmatpush.bf16.msra.mxu0 0
        %841 = vmatpush.bf16.msra.mxu0 0
        %842 = vmatpush.bf16.msra.mxu0 0
        %843 = vmatpush.bf16.msra.mxu0 0
        %844 = vmatpush.bf16.msra.mxu0 0
        %845 = vmatpush.bf16.msra.mxu0 0
        %846 = vmatpush.bf16.msra.mxu0 0
        %847 = vmatpush.bf16.msra.mxu0 %v835
        %848 = vmatmul.bf16.gmra.mxu0 %v838
        %v849 = vpop.f32.mrf.mxu0
        %v850 = vadd.f32 0.0, %v849
        %v851 = vpop.f32.mrf.mxu0
        %v852 = vadd.f32 0.0, %v851
        %853 = vdwg.mxu0
        %v854 = vpack.c.bf16 %v850, %v850
        %v855 = vpack.c.bf16 %v852, %v852
        %858 = vrot.lane.b32.xlu0 %v854, 32
        %v859 = vpop.permute.xlu0 %858
        %860 = vrot.lane.b32.xlu0 %v855, 32
        %v861 = vpop.permute.xlu0 %860
        %vm864 = vcmask 519424
        %865 = vst.msk [vmem:[#allocation2] sm:$0xf] %vm864, %v859
        %866 = vst.msk [vmem:[#allocation2 + $0x4] sm:$0xf] %vm864, %v861
        %867 = vrot.lane.b32.xlu0 %v710, 64
        %v868 = vpop.permute.xlu0 %867
        %869 = vrot.lane.b32.xlu0 %v711, 64
        %v870 = vpop.permute.xlu0 %869
        %v872 = vsel %vm713, %v868, 0
        %v875 = vsel %vm713, %v870, 0
        %877 = vmatpush.bf16.xpose.msra.mxu0 0
        %878 = vmatpush.bf16.xpose.msra.mxu0 0
        %879 = vmatpush.bf16.xpose.msra.mxu0 0
        %880 = vmatpush.bf16.xpose.msra.mxu0 0
        %881 = vmatpush.bf16.xpose.msra.mxu0 0
        %882 = vmatpush.bf16.xpose.msra.mxu0 0
        %883 = vmatpush.bf16.xpose.msra.mxu0 0
        %884 = vmatpush.bf16.xpose.msra.mxu0 %v875
        %885 = vmatmul.bf16.gmra.mxu0 %v872
        %v886 = vpop.f32.mrf.mxu0
        %v887 = vadd.f32 0.0, %v886
        %v888 = vpop.f32.mrf.mxu0
        %v889 = vadd.f32 0.0, %v888
        %890 = vdwg.mxu0
        %v891 = vmul.f32 %v887, 0.17677669
        %v892 = vmul.f32 %v889, 0.17677669
        %v893 = vsel %vm736, %v891, -inf
        %894 = vmax.xlane.f32.xlu0 %v893
        %v895 = vpop.xlane.xlu0 %894
        %v896 = vsel %vm736, %v892, -inf
        %897 = vmax.xlane.f32.xlu0 %v896
        %v898 = vpop.xlane.xlu0 %897
        %v899 = vsub.f32 %v891, %v895
        %v900 = vsub.f32 %v892, %v898
        %v901 = vmul.f32 %v899, 1.442695
        %v902 = vpow.pop %v901
        %v903 = vmul.f32 %v900, 1.442695
        %v904 = vpow.pop %v903
        %v905 = vsel %vm736, %v902, 0.0
        %906 = vadd.xlane.f32.xlu0 %v905
        %v907 = vpop.xlane.xlu0 %906
        %v908 = vsel %vm736, %v904, 0.0
        %909 = vadd.xlane.f32.xlu0 %v908
        %v910 = vpop.xlane.xlu0 %909
        %v911 = vrcp.pop %v907
        %v912 = vrcp.pop %v910
        %v913 = vmul.f32 %v902, %v911
        %v914 = vmul.f32 %v904, %v912
        %v915 = vpack.c.bf16 %v914, %v913
        %916 = vrot.lane.b32.xlu0 %v712, 64
        %v917 = vpop.permute.xlu0 %916
        %v920 = vsel %vm736, %v915, 0
        %922 = vmatpush.bf16.msra.mxu0 0
        %923 = vmatpush.bf16.msra.mxu0 0
        %924 = vmatpush.bf16.msra.mxu0 0
        %925 = vmatpush.bf16.msra.mxu0 0
        %926 = vmatpush.bf16.msra.mxu0 0
        %927 = vmatpush.bf16.msra.mxu0 0
        %928 = vmatpush.bf16.msra.mxu0 0
        %929 = vmatpush.bf16.msra.mxu0 %v917
        %930 = vmatmul.bf16.gmra.mxu0 %v920
        %v931 = vpop.f32.mrf.mxu0
        %v932 = vadd.f32 0.0, %v931
        %v933 = vpop.f32.mrf.mxu0
        %v934 = vadd.f32 0.0, %v933
        %935 = vdwg.mxu0
        %v936 = vpack.c.bf16 %v932, %v932
        %v937 = vpack.c.bf16 %v934, %v934
        %940 = vrot.lane.b32.xlu0 %v936, 64
        %v941 = vpop.permute.xlu0 %940
        %942 = vrot.lane.b32.xlu0 %v937, 64
        %v943 = vpop.permute.xlu0 %942
        %vm946 = vcmask 781824
        %947 = vst.msk [vmem:[#allocation2] sm:$0xf] %vm946, %v941
        %948 = vst.msk [vmem:[#allocation2 + $0x4] sm:$0xf] %vm946, %v943
        %949 = vrot.lane.b32.xlu0 %v710, 32
        %v950 = vpop.permute.xlu0 %949
        %951 = vrot.lane.b32.xlu0 %v711, 32
        %v952 = vpop.permute.xlu0 %951
        %v954 = vsel %vm713, %v950, 0
        %v957 = vsel %vm713, %v952, 0
        %959 = vmatpush.bf16.xpose.msra.mxu0 0
        %960 = vmatpush.bf16.xpose.msra.mxu0 0
        %961 = vmatpush.bf16.xpose.msra.mxu0 0
        %962 = vmatpush.bf16.xpose.msra.mxu0 0
        %963 = vmatpush.bf16.xpose.msra.mxu0 0
        %964 = vmatpush.bf16.xpose.msra.mxu0 0
        %965 = vmatpush.bf16.xpose.msra.mxu0 0
        %966 = vmatpush.bf16.xpose.msra.mxu0 %v957
        %967 = vmatmul.bf16.gmra.mxu0 %v954
        %v968 = vpop.f32.mrf.mxu0
        %v969 = vadd.f32 0.0, %v968
        %v970 = vpop.f32.mrf.mxu0
        %v971 = vadd.f32 0.0, %v970
        %972 = vdwg.mxu0
        %v973 = vmul.f32 %v969, 0.17677669
        %v974 = vmul.f32 %v971, 0.17677669
        %v975 = vsel %vm736, %v973, -inf
        %976 = vmax.xlane.f32.xlu0 %v975
        %v977 = vpop.xlane.xlu0 %976
        %v978 = vsel %vm736, %v974, -inf
        %979 = vmax.xlane.f32.xlu0 %v978
        %v980 = vpop.xlane.xlu0 %979
        %v981 = vsub.f32 %v973, %v977
        %v982 = vsub.f32 %v974, %v980
        %v983 = vmul.f32 %v981, 1.442695
        %v984 = vpow.pop %v983
        %v985 = vmul.f32 %v982, 1.442695
        %v986 = vpow.pop %v985
        %v987 = vsel %vm736, %v984, 0.0
        %988 = vadd.xlane.f32.xlu0 %v987
        %v989 = vpop.xlane.xlu0 %988
        %v990 = vsel %vm736, %v986, 0.0
        %991 = vadd.xlane.f32.xlu0 %v990
        %v992 = vpop.xlane.xlu0 %991
        %v993 = vrcp.pop %v989
        %v994 = vrcp.pop %v992
        %v995 = vmul.f32 %v984, %v993
        %v996 = vmul.f32 %v986, %v994
        %v997 = vpack.c.bf16 %v996, %v995
        %998 = vrot.lane.b32.xlu0 %v712, 32
        %v999 = vpop.permute.xlu0 %998
        %v1002 = vsel %vm736, %v997, 0
        %1004 = vmatpush.bf16.msra.mxu0 0
        %1005 = vmatpush.bf16.msra.mxu0 0
        %1006 = vmatpush.bf16.msra.mxu0 0
        %1007 = vmatpush.bf16.msra.mxu0 0
        %1008 = vmatpush.bf16.msra.mxu0 0
        %1009 = vmatpush.bf16.msra.mxu0 0
        %1010 = vmatpush.bf16.msra.mxu0 0
        %1011 = vmatpush.bf16.msra.mxu0 %v999
        %1012 = vmatmul.bf16.gmra.mxu0 %v1002
        %v1013 = vpop.f32.mrf.mxu0
        %v1014 = vadd.f32 0.0, %v1013
        %v1015 = vpop.f32.mrf.mxu0
        %v1016 = vadd.f32 0.0, %v1015
        %1017 = vdwg.mxu0
        %v1018 = vpack.c.bf16 %v1014, %v1014
        %v1019 = vpack.c.bf16 %v1016, %v1016
        %1022 = vrot.lane.b32.xlu0 %v1018, 96
        %v1023 = vpop.permute.xlu0 %1022
        %1024 = vrot.lane.b32.xlu0 %v1019, 96
        %v1025 = vpop.permute.xlu0 %1024
        %vm1028 = vcmask 1044224
        %1029 = vst.msk [vmem:[#allocation2] sm:$0xf] %vm1028, %v1023
        %1030 = vst.msk [vmem:[#allocation2 + $0x4] sm:$0xf] %vm1028, %v1025
        %v1031 = vld [vmem:[#allocation2] sm:$0xf]
        %v1032 = vld [vmem:[#allocation2 + $0x4] sm:$0xf]
        %v1033 = vld [vmem:[#allocation11] sm:$0xf]
        %v1034 = vld [vmem:[#allocation11 + $0x4] sm:$0xf]
        %v1035 = vld [vmem:[#allocation11 + $0x8] sm:$0xf]
        %v1036 = vld [vmem:[#allocation11 + $0xc] sm:$0xf]
        %v1037 = vld [vmem:[#allocation11 + $0x10] sm:$0xf]
        %v1038 = vld [vmem:[#allocation11 + $0x14] sm:$0xf]
        %v1039 = vld [vmem:[#allocation11 + $0x18] sm:$0xf]
        %v1040 = vld [vmem:[#allocation11 + $0x1c] sm:$0xf]
        %v1041 = vld [vmem:[#allocation11 + $0x20] sm:$0xf]
        %v1042 = vld [vmem:[#allocation11 + $0x24] sm:$0xf]
        %v1043 = vld [vmem:[#allocation11 + $0x28] sm:$0xf]
        %v1044 = vld [vmem:[#allocation11 + $0x2c] sm:$0xf]
        %v1045 = vld [vmem:[#allocation11 + $0x30] sm:$0xf]
        %v1046 = vld [vmem:[#allocation11 + $0x34] sm:$0xf]
        %v1047 = vld [vmem:[#allocation11 + $0x38] sm:$0xf]
        %v1048 = vld [vmem:[#allocation11 + $0x3c] sm:$0xf]
        %v1049 = vld [vmem:[%s7] sm:$0x1]
        %v1051 = vperm.slane %v1049, 0
        %v1055 = vunpack.c.l.b16 %v1031
        %v1056 = vunpack.c.l.b16 %v1032
        %v1057 = vpack.c.b16 %v1056, %v1055
        %v1075 = vunpack.c.l.b16 %v1033
        %v1076 = vunpack.c.l.b16 %v1034
        %v1077 = vunpack.c.l.b16 %v1035
        %v1078 = vunpack.c.l.b16 %v1036
        %v1079 = vunpack.c.l.b16 %v1037
        %v1080 = vunpack.c.l.b16 %v1038
        %v1081 = vunpack.c.l.b16 %v1039
        %v1082 = vunpack.c.l.b16 %v1040
        %v1083 = vunpack.c.l.b16 %v1041
        %v1084 = vunpack.c.l.b16 %v1042
        %v1085 = vunpack.c.l.b16 %v1043
        %v1086 = vunpack.c.l.b16 %v1044
        %v1087 = vunpack.c.l.b16 %v1045
        %v1088 = vunpack.c.l.b16 %v1046
        %v1089 = vunpack.c.l.b16 %v1047
        %v1090 = vunpack.c.l.b16 %v1048
        %v1091 = vpack.c.b16 %v1076, %v1075
        %v1092 = vpack.c.b16 %v1078, %v1077
        %v1093 = vpack.c.b16 %v1080, %v1079
        %v1094 = vpack.c.b16 %v1082, %v1081
        %v1095 = vpack.c.b16 %v1084, %v1083
        %v1096 = vpack.c.b16 %v1086, %v1085
        %v1097 = vpack.c.b16 %v1088, %v1087
        %v1098 = vpack.c.b16 %v1090, %v1089
        %1107 = vmatpush.bf16.msra.mxu0 %v1098
        %1108 = vmatpush.bf16.msra.mxu0 %v1097
        %1109 = vmatpush.bf16.msra.mxu0 %v1096
        %1110 = vmatpush.bf16.msra.mxu0 %v1095
        %1111 = vmatpush.bf16.msra.mxu0 %v1094
        %1112 = vmatpush.bf16.msra.mxu0 %v1093
        %1113 = vmatpush.bf16.msra.mxu0 %v1092
        %1114 = vmatpush.bf16.msra.mxu0 %v1091
        %1115 = vmatmul.bf16.gmra.mxu0 %v1057
        %v1116 = vpop.f32.mrf.mxu0
        %v1117 = vadd.f32 %v1051, %v1116
        %v1118 = vpop.f32.mrf.mxu0
        %v1119 = vadd.f32 %v1051, %v1118
        %1120 = vdwg.mxu0
        %v1121 = vadd.f32 %v1117, %v492
        %v1122 = vadd.f32 %v1119, %v493
        %1123 = vadd.xlane.f32.xlu0 %v1121
        %v1124 = vpop.xlane.xlu0 %1123
        %1125 = vadd.xlane.f32.xlu0 %v1122
        %v1126 = vpop.xlane.xlu0 %1125
        %v1127 = vrcp.pop 128.0
        %v1128 = vmul.f32 128.0, %v1127
        %v1129 = vsub.f32 1.0, %v1128
        %v1130 = vmul.f32 %v1127, %v1129
        %v1131 = vadd.f32 %v1127, %v1130
        %vm1132 = vweird.f32 %v1127
        %v1133 = vsel %vm1132, %v1127, %v1131
        %v1134 = vmul.f32 %v1124, %v1133
        %v1135 = vmul.f32 %v1126, %v1133
        %v1136 = vsub.f32 %v1121, %v1134
        %v1137 = vsub.f32 %v1122, %v1135
        %v1138 = vmul.f32 %v1136, %v1136
        %v1139 = vmul.f32 %v1137, %v1137
        %1140 = vadd.xlane.f32.xlu0 %v1138
        %v1141 = vpop.xlane.xlu0 %1140
        %1142 = vadd.xlane.f32.xlu0 %v1139
        %v1143 = vpop.xlane.xlu0 %1142
        %v1144 = vmul.f32 %v1141, %v1133
        %v1145 = vmul.f32 %v1143, %v1133
        %v1146 = vadd.f32 %v1144, 1e-05
        %v1147 = vadd.f32 %v1145, 1e-05
        %v1148 = vrsqrt.pop %v1146
        %v1149 = vmul.f32 %v1148, %v1146
        %v1150 = vmul.f32 %v1149, %v1148
        %v1151 = vmul.f32 0.5, %v1150
        %v1152 = vsub.f32 1.5, %v1151
        %v1153 = vmul.f32 %v1148, %v1152
        %vm1154 = vweird.f32 %v1146
        %vm1155 = vweird.f32 %v1148
        %vm1156 = vmor %vm1154, %vm1155
        %v1157 = vsel %vm1156, %v1148, %v1153
        %v1158 = vrsqrt.pop %v1147
        %v1159 = vmul.f32 %v1158, %v1147
        %v1160 = vmul.f32 %v1159, %v1158
        %v1161 = vmul.f32 0.5, %v1160
        %v1162 = vsub.f32 1.5, %v1161
        %v1163 = vmul.f32 %v1158, %v1162
        %vm1164 = vweird.f32 %v1147
        %vm1165 = vweird.f32 %v1158
        %vm1166 = vmor %vm1164, %vm1165
        %v1167 = vsel %vm1166, %v1158, %v1163
        %v1168 = vmul.f32 %v1136, %v1157
        %v1169 = vmul.f32 %v1137, %v1167
        %v1170 = vld [vmem:[%s8] sm:$0x1]
        %v1172 = vperm.slane %v1170, 0
        %v1174 = vmul.f32 %v1168, %v1172
        %v1175 = vmul.f32 %v1169, %v1172
        %v1176 = vld [vmem:[%s9] sm:$0x1]
        %v1178 = vperm.slane %v1176, 0
        %v1180 = vadd.f32 %v1174, %v1178
        %v1181 = vadd.f32 %v1175, %v1178
        %1182 = vst [vmem:[%s488] sm:$0xff] %v1180
        %1183 = vst [vmem:[%s488 + $0x8] sm:$0xff] %v1181
        %s1184 = sand.u32 %s275, 1
        %s1185 = scalar_lea.sflag [#allocation5], %s1184
        %s1186 = sand.u32 %s275, 1
        %s1187 = smul.addr %s1186, 16
        %s1188 = scalar_lea.vmem [#allocation12], %s1187
        // Predicated region
        $region81: #{tpu_custom_call.1} parent=59 // pred_check
          %p1189 = pneg %p285
        $region82: #{tpu_custom_call.1} parent=59 // pred_check_branch
          %1191 = sbr.rel (%p1189) target = $region84
        $region83: #{tpu_custom_call.1} parent=59 // pred_region
          %s1192 = smul.u32 2, %s36
          %1194 = vsyncadd %s1185, 0
          %s1195 = smul.addr %s35, 2
          %s1196 = sadd.s32 %s1192, %s1195
          %s1197 = smul.addr %s1196, 8
          %s1198 = scalar_lea.hbm %s10, %s1197
          %s1199 = sshll.u32 %s1188, 4
          %s1200 = int_to_ptr.vmem [resolvable:$true] %s1199
          %s1201 = sshll.u32 %s1198, 4
          %s1202 = int_to_ptr.hbm [resolvable:$true] %s1201
          %1207 = dma.vmem_to_hbm [thread:$0]  %s1200, 256, %s1202, %s1185, 128, 128, 8
        $region84: #{tpu_custom_call.1} parent=59 // pred_fallthru
          _
      $region60: #{tpu_custom_call.1} parent=5 // pred_fallthru
        _
      %p1208 = scmp.le.s32.totalorder 2, %s26
      // Predicated region
      $region85: #{tpu_custom_call.1} parent=5 // pred_check
        %p1209 = pneg %p1208
      $region86: #{tpu_custom_call.1} parent=5 // pred_check_branch
        %1211 = sbr.rel (%p1209) target = $region88
      $region87: #{tpu_custom_call.1} parent=5 // pred_region
        %s1212 = ssub.s32 %s26, 2
        // Predicated region
        $region89: #{tpu_custom_call.1} parent=87 // pred_check
          %p1213 = pneg %p291
        $region90: #{tpu_custom_call.1} parent=87 // pred_check_branch
          %1215 = sbr.rel (%p1213) target = $region92
        $region91: #{tpu_custom_call.1} parent=87 // pred_region
          %s1216 = sand.u32 %s276, 1
          %s1217 = scalar_lea.sflag [#allocation5], %s1216
          %s1218 = sand.u32 %s276, 1
          %s1219 = smul.addr %s1218, 16
          %s1220 = scalar_lea.vmem [#allocation12], %s1219
          %1222 = dma.done %s1217, 256
        $region92: #{tpu_custom_call.1} parent=87 // pred_fallthru
          _
      $region88: #{tpu_custom_call.1} parent=5 // pred_fallthru
        _
    $region6: #{tpu_custom_call.1} parent=1 // loop_footer
      %s30 = sadd.s32 1, %s26
    $region7: #{tpu_custom_call.1} parent=1 // loop_footer_branch
      %25 = sbr.rel target = $region3
    $region8: #{tpu_custom_call.1} parent=1 // loop_exit
      _
    %1223 = vsyncpa [#allocation4], 1
    %s1224 = scalar_lea.sflag [#allocation4], 1
    %1225 = vsyncpa %s1224, 1
    %1226 = vsyncpa [#allocation7], 1
    %s1227 = scalar_lea.sflag [#allocation7], 1
    %1228 = vsyncpa %s1227, 1
    %1229 = vsyncpa [#allocation10], 1
    %1230 = vsyncpa [#allocation5], 1
    %s1231 = scalar_lea.sflag [#allocation5], 1
    %1232 = vsyncpa %s1231, 1

</llo_original>
